<compile_context>
chip_gen: v6e
topology: v6e:2x2x1
jax: 0.10.0
libtpu: 0.0.40
codegen_flags: <defaults>
</compile_context>

<pallas_src>
import functools

import jax
import jax.numpy as jnp
from jax.experimental import pallas as pl
from jax.experimental.pallas import tpu as pltpu


def digitcaps_kernel(x_ref, w_ref, bc_ref, bct_ref, si_ref, sit_ref, v_ref,
                     *, B, IC, NC, OC, n_iter):
    """x_ref:  (B, IC*L)           flattened input capsules
       w_ref:  (IC*L, IC*NC*OC)    block-diagonal repacked weight
       bc_ref: (IC*NC, IC*NC*OC)   0/1 selector: broadcast over OC
       bct_ref:(IC*NC*OC, IC*NC)   0/1 selector: sum over OC
       si_ref: (IC*NC*OC, NC*OC)   0/1 selector: sum over IC
       sit_ref:(NC*OC, IC*NC*OC)   0/1 selector: tile over IC
       v_ref:  (B, NC*OC)          output capsules (lane-dense slab)."""
    NOC = NC * OC

    # ---- priors: one fused block-diagonal MXU matmul.
    # P[b, i*NOC + n*OC + o] = sum_l x[b, i, l] * W[n, i, l, o]
    P = jnp.dot(x_ref[...], w_ref[...], preferred_element_type=jnp.float32)  # (B, IC*NOC)

    # ---- dynamic routing (n_iter is small & static -> unrolled)
    blog = jnp.zeros((B, IC * NC), jnp.float32)   # compact b (constant across OC per block)
    v = jnp.zeros((B, NOC), jnp.float32)
    for it in range(n_iter):
        if it == 0:
            # softmax of all-zero logits over the batch axis == exactly 1/B
            c_small = jnp.full((B, IC * NC), 1.0 / B, jnp.float32)            # (B, IC*NC)
        else:
            # softmax over the BATCH axis (== torch F.softmax default dim=1 on the 5-D b)
            e = jnp.exp(blog - jnp.max(blog, axis=0, keepdims=True))
            c_small = e / jnp.sum(e, axis=0, keepdims=True)                   # (B, IC*NC)
        # broadcast coupling coefficients across OC lanes (MXU)
        c_full = jnp.dot(c_small, bc_ref[...],
                         preferred_element_type=jnp.float32)                  # (B, IC*NOC)
        # s_j = sum over in_channels of c * priors  (reduce over IC via MXU)
        s = jnp.dot(c_full * P, si_ref[...],
                    preferred_element_type=jnp.float32)                       # (B, NOC)
        # _squash with the GLOBAL Frobenius norm of s_j: scale = sqrt(sq) / (1 + sq)
        sq = jnp.sum(s * s)
        scale = sq * jax.lax.rsqrt(sq) / (1.0 + sq)
        v = s * scale                                                         # (B, NOC)
        if it + 1 < n_iter:
            # agreement: sum over OC of priors * v, broadcast back into b.
            # Tile v across IC (MXU), elementwise multiply, reduce over OC (MXU).
            v_rep = jnp.dot(v, sit_ref[...],
                            preferred_element_type=jnp.float32)               # (B, IC*NOC)
            agree = jnp.dot(P * v_rep, bct_ref[...],
                            preferred_element_type=jnp.float32)               # (B, IC*NC)
            blog = blog + agree

    v_ref[...] = v


def digitcaps_forward(x, weight, num_routing_iter):
    """x: (B, IC, L) f32, weight: (NC, IC, L, OC) f32 -> v_j: (NC, B, 1, 1, OC) f32."""
    NC, IC, L, OC = weight.shape
    B = x.shape[0]
    NOC = NC * OC

    # --- glue (constant-folded / fused under jit) ---
    # Block-diagonal weight: Wbd[i*L + l, i*NOC + n*OC + o] = W[n, i, l, o]
    w_perm = jnp.transpose(weight, (1, 2, 0, 3)).reshape(IC, L, NOC)          # (IC, L, NOC)
    wbd = jnp.einsum("ij,ilm->iljm", jnp.eye(IC, dtype=jnp.float32),
                     w_perm.astype(jnp.float32)).reshape(IC * L, IC * NOC)
    x_flat = x.reshape(B, IC * L).astype(jnp.float32)

    # Constant 0/1 selector matrices used to keep routing lane-dense on the MXU.
    k = jnp.arange(IC * NOC)
    j = jnp.arange(IC * NC)
    m = jnp.arange(NOC)
    bc = (k[None, :] // OC == j[:, None]).astype(jnp.float32)                 # (IC*NC, IC*NOC)
    bct = jnp.transpose(bc)                                                   # (IC*NOC, IC*NC)
    si = (k[:, None] % NOC == m[None, :]).astype(jnp.float32)                 # (IC*NOC, NOC)
    sit = jnp.transpose(si)                                                   # (NOC, IC*NOC)

    kernel = functools.partial(
        digitcaps_kernel, B=B, IC=IC, NC=NC, OC=OC, n_iter=num_routing_iter
    )
    # Everything fits comfortably in VMEM -> no grid, no pipelining.
    # (Batch axis can NOT be gridded: softmax is over batch and the squash norm is global.)
    v = pl.pallas_call(
        kernel,
        out_shape=jax.ShapeDtypeStruct((B, NOC), jnp.float32),
        in_specs=[pl.BlockSpec(memory_space=pltpu.MemorySpace.VMEM)] * 6,
        out_specs=pl.BlockSpec(memory_space=pltpu.MemorySpace.VMEM),
    )(x_flat, wbd, bc, bct, si, sit)

    # (B, NC*OC) -> (NC, B, 1, 1, OC), the exact PyTorch output shape.
    return jnp.transpose(v.reshape(B, NC, OC), (1, 0, 2)).reshape(NC, B, 1, 1, OC)


def digitcaps_reference(x, weight, num_routing_iter):
    """Pure-JAX transcription of the PyTorch forward, for verification."""
    priors = jnp.einsum("bil,nilo->nbio", x, weight)[:, :, :, None, :]  # (NC,B,IC,1,OC)
    b = jnp.zeros_like(priors)
    v = None
    for _ in range(num_routing_iter):
        c = jax.nn.softmax(b, axis=1)                       # F.softmax default dim=1
        s = jnp.sum(c * priors, axis=2, keepdims=True)      # (NC,B,1,1,OC)
        nrm = jnp.sqrt(jnp.sum(s * s))                      # global Frobenius norm
        coeff = nrm ** 2 / (1.0 + nrm ** 2)
        v = coeff * (s / nrm)
        b = b + jnp.sum(priors * v, axis=-1, keepdims=True)
    return v                                                # (NC, B, 1, 1, OC)


if __name__ == "__main__":
    # small shapes consistent with the module's __init__/forward
    B, IC, L, OC, NC = 2, 8, 8, 16, 4        # batch, in_channels, capsule_length, out_channels, num_capsules
    num_classes, num_routing_iter = 10, 3    # digit_weights (num_classes x (L,16)) unused in forward
    # TODO(synk): self.digit_weights are created in __init__ but never used in forward -> not modeled.

    key = jax.random.PRNGKey(0)
    kx, kw = jax.random.split(key)
    x = jax.random.normal(kx, (B, IC, L), dtype=jnp.float32)
    weight = jax.random.normal(kw, (NC, IC, L, OC), dtype=jnp.float32)  # ~ torch.randn init

    fwd = jax.jit(digitcaps_forward, static_argnums=2)
    out = jax.block_until_ready(fwd(x, weight, num_routing_iter))
    ref = digitcaps_reference(x, weight, num_routing_iter)

    assert out.shape == (NC, B, 1, 1, OC), out.shape
    err = float(jnp.max(jnp.abs(out - ref)))
    if err < 1e-3:
        print("KERNEL_OK")
    else:
        print("MISMATCH max_abs_err =", err)
</pallas_src>

<mosaic_0001>
module attributes {stable_mosaic.version = 11 : i64} {
  func.func @digitcaps_kernel(%arg0: memref<2x64xf32, #tpu.memory_space<vmem>>, %arg1: memref<64x512xf32, #tpu.memory_space<vmem>>, %arg2: memref<32x512xf32, #tpu.memory_space<vmem>>, %arg3: memref<512x32xf32, #tpu.memory_space<vmem>>, %arg4: memref<512x64xf32, #tpu.memory_space<vmem>>, %arg5: memref<64x512xf32, #tpu.memory_space<vmem>>, %arg6: memref<2x64xf32, #tpu.memory_space<vmem>>) attributes {dimension_semantics = [], scalar_prefetch = 0 : i64, scratch_operands = 0 : i64, tpu.core_type = #tpu.core_type<tc>} {
    %c0 = arith.constant 0 : index
    %c0_0 = arith.constant 0 : index
    %0 = vector.load %arg0[%c0, %c0_0] : memref<2x64xf32, #tpu.memory_space<vmem>>, vector<2x64xf32>
    %c0_1 = arith.constant 0 : index
    %c0_2 = arith.constant 0 : index
    %1 = vector.load %arg1[%c0_1, %c0_2] : memref<64x512xf32, #tpu.memory_space<vmem>>, vector<64x512xf32>
    %cst = arith.constant dense<0.000000e+00> : vector<2x512xf32>
    %2 = tpu.matmul %0, %1, %cst {dimension_numbers = #tpu.dot_dimension_numbers<[1], [0], [0], [1], [0, 0, 1, 1], [], []>} : vector<2x64xf32>, vector<64x512xf32>, vector<2x512xf32> -> vector<2x512xf32>
    %cst_3 = arith.constant 0.000000e+00 : f32
    %3 = vector.broadcast %cst_3 : f32 to vector<2x32xf32>
    %cst_4 = arith.constant 5.000000e-01 : f32
    %4 = vector.broadcast %cst_4 : f32 to vector<2x32xf32>
    %c0_5 = arith.constant 0 : index
    %c0_6 = arith.constant 0 : index
    %5 = vector.load %arg2[%c0_5, %c0_6] : memref<32x512xf32, #tpu.memory_space<vmem>>, vector<32x512xf32>
    %cst_7 = arith.constant dense<0.000000e+00> : vector<2x512xf32>
    %6 = tpu.matmul %4, %5, %cst_7 {dimension_numbers = #tpu.dot_dimension_numbers<[1], [0], [0], [1], [0, 0, 1, 1], [], []>} : vector<2x32xf32>, vector<32x512xf32>, vector<2x512xf32> -> vector<2x512xf32>
    %7 = arith.mulf %6, %2 : vector<2x512xf32>
    %c0_8 = arith.constant 0 : index
    %c0_9 = arith.constant 0 : index
    %8 = vector.load %arg4[%c0_8, %c0_9] : memref<512x64xf32, #tpu.memory_space<vmem>>, vector<512x64xf32>
    %cst_10 = arith.constant dense<0.000000e+00> : vector<2x64xf32>
    %9 = tpu.matmul %7, %8, %cst_10 {dimension_numbers = #tpu.dot_dimension_numbers<[1], [0], [0], [1], [0, 0, 1, 1], [], []>} : vector<2x512xf32>, vector<512x64xf32>, vector<2x64xf32> -> vector<2x64xf32>
    %10 = arith.mulf %9, %9 : vector<2x64xf32>
    %11 = vector.shape_cast %10 : vector<2x64xf32> to vector<1x2x64xf32>
    %cst_11 = arith.constant dense<0.000000e+00> : vector<1xf32>
    %12 = vector.multi_reduction <add>, %11, %cst_11 [1, 2] : vector<1x2x64xf32> to vector<1xf32>
    %13 = vector.shape_cast %12 : vector<1xf32> to vector<1x1x1xf32>
    %14 = vector.extract %13[0, 0, 0] : f32 from vector<1x1x1xf32>
    %15 = math.rsqrt %14 : f32
    %16 = arith.mulf %14, %15 : f32
    %cst_12 = arith.constant 1.000000e+00 : f32
    %17 = arith.addf %cst_12, %14 : f32
    %18 = arith.divf %16, %17 : f32
    %19 = vector.broadcast %18 : f32 to vector<2x64xf32>
    %20 = arith.mulf %9, %19 : vector<2x64xf32>
    %c0_13 = arith.constant 0 : index
    %c0_14 = arith.constant 0 : index
    %21 = vector.load %arg5[%c0_13, %c0_14] : memref<64x512xf32, #tpu.memory_space<vmem>>, vector<64x512xf32>
    %cst_15 = arith.constant dense<0.000000e+00> : vector<2x512xf32>
    %22 = tpu.matmul %20, %21, %cst_15 {dimension_numbers = #tpu.dot_dimension_numbers<[1], [0], [0], [1], [0, 0, 1, 1], [], []>} : vector<2x64xf32>, vector<64x512xf32>, vector<2x512xf32> -> vector<2x512xf32>
    %23 = arith.mulf %2, %22 : vector<2x512xf32>
    %c0_16 = arith.constant 0 : index
    %c0_17 = arith.constant 0 : index
    %24 = vector.load %arg3[%c0_16, %c0_17] : memref<512x32xf32, #tpu.memory_space<vmem>>, vector<512x32xf32>
    %cst_18 = arith.constant dense<0.000000e+00> : vector<2x32xf32>
    %25 = tpu.matmul %23, %24, %cst_18 {dimension_numbers = #tpu.dot_dimension_numbers<[1], [0], [0], [1], [0, 0, 1, 1], [], []>} : vector<2x512xf32>, vector<512x32xf32>, vector<2x32xf32> -> vector<2x32xf32>
    %26 = arith.addf %3, %25 : vector<2x32xf32>
    %cst_19 = arith.constant dense<0xFF800000> : vector<32xf32>
    %27 = vector.multi_reduction <maximumf>, %26, %cst_19 [0] : vector<2x32xf32> to vector<32xf32>
    %28 = vector.shape_cast %27 : vector<32xf32> to vector<1x32xf32>
    %29 = vector.broadcast %28 : vector<1x32xf32> to vector<2x32xf32>
    %30 = arith.subf %26, %29 : vector<2x32xf32>
    %31 = math.exp %30 : vector<2x32xf32>
    %cst_20 = arith.constant dense<0.000000e+00> : vector<32xf32>
    %32 = vector.multi_reduction <add>, %31, %cst_20 [0] : vector<2x32xf32> to vector<32xf32>
    %33 = vector.shape_cast %32 : vector<32xf32> to vector<1x32xf32>
    %34 = vector.broadcast %33 : vector<1x32xf32> to vector<2x32xf32>
    %35 = arith.divf %31, %34 : vector<2x32xf32>
    %c0_21 = arith.constant 0 : index
    %c0_22 = arith.constant 0 : index
    %36 = vector.load %arg2[%c0_21, %c0_22] : memref<32x512xf32, #tpu.memory_space<vmem>>, vector<32x512xf32>
    %cst_23 = arith.constant dense<0.000000e+00> : vector<2x512xf32>
    %37 = tpu.matmul %35, %36, %cst_23 {dimension_numbers = #tpu.dot_dimension_numbers<[1], [0], [0], [1], [0, 0, 1, 1], [], []>} : vector<2x32xf32>, vector<32x512xf32>, vector<2x512xf32> -> vector<2x512xf32>
    %38 = arith.mulf %37, %2 : vector<2x512xf32>
    %c0_24 = arith.constant 0 : index
    %c0_25 = arith.constant 0 : index
    %39 = vector.load %arg4[%c0_24, %c0_25] : memref<512x64xf32, #tpu.memory_space<vmem>>, vector<512x64xf32>
    %cst_26 = arith.constant dense<0.000000e+00> : vector<2x64xf32>
    %40 = tpu.matmul %38, %39, %cst_26 {dimension_numbers = #tpu.dot_dimension_numbers<[1], [0], [0], [1], [0, 0, 1, 1], [], []>} : vector<2x512xf32>, vector<512x64xf32>, vector<2x64xf32> -> vector<2x64xf32>
    %41 = arith.mulf %40, %40 : vector<2x64xf32>
    %42 = vector.shape_cast %41 : vector<2x64xf32> to vector<1x2x64xf32>
    %cst_27 = arith.constant dense<0.000000e+00> : vector<1xf32>
    %43 = vector.multi_reduction <add>, %42, %cst_27 [1, 2] : vector<1x2x64xf32> to vector<1xf32>
    %44 = vector.shape_cast %43 : vector<1xf32> to vector<1x1x1xf32>
    %45 = vector.extract %44[0, 0, 0] : f32 from vector<1x1x1xf32>
    %46 = math.rsqrt %45 : f32
    %47 = arith.mulf %45, %46 : f32
    %cst_28 = arith.constant 1.000000e+00 : f32
    %48 = arith.addf %cst_28, %45 : f32
    %49 = arith.divf %47, %48 : f32
    %50 = vector.broadcast %49 : f32 to vector<2x64xf32>
    %51 = arith.mulf %40, %50 : vector<2x64xf32>
    %c0_29 = arith.constant 0 : index
    %c0_30 = arith.constant 0 : index
    %52 = vector.load %arg5[%c0_29, %c0_30] : memref<64x512xf32, #tpu.memory_space<vmem>>, vector<64x512xf32>
    %cst_31 = arith.constant dense<0.000000e+00> : vector<2x512xf32>
    %53 = tpu.matmul %51, %52, %cst_31 {dimension_numbers = #tpu.dot_dimension_numbers<[1], [0], [0], [1], [0, 0, 1, 1], [], []>} : vector<2x64xf32>, vector<64x512xf32>, vector<2x512xf32> -> vector<2x512xf32>
    %54 = arith.mulf %2, %53 : vector<2x512xf32>
    %c0_32 = arith.constant 0 : index
    %c0_33 = arith.constant 0 : index
    %55 = vector.load %arg3[%c0_32, %c0_33] : memref<512x32xf32, #tpu.memory_space<vmem>>, vector<512x32xf32>
    %cst_34 = arith.constant dense<0.000000e+00> : vector<2x32xf32>
    %56 = tpu.matmul %54, %55, %cst_34 {dimension_numbers = #tpu.dot_dimension_numbers<[1], [0], [0], [1], [0, 0, 1, 1], [], []>} : vector<2x512xf32>, vector<512x32xf32>, vector<2x32xf32> -> vector<2x32xf32>
    %57 = arith.addf %26, %56 : vector<2x32xf32>
    %cst_35 = arith.constant dense<0xFF800000> : vector<32xf32>
    %58 = vector.multi_reduction <maximumf>, %57, %cst_35 [0] : vector<2x32xf32> to vector<32xf32>
    %59 = vector.shape_cast %58 : vector<32xf32> to vector<1x32xf32>
    %60 = vector.broadcast %59 : vector<1x32xf32> to vector<2x32xf32>
    %61 = arith.subf %57, %60 : vector<2x32xf32>
    %62 = math.exp %61 : vector<2x32xf32>
    %cst_36 = arith.constant dense<0.000000e+00> : vector<32xf32>
    %63 = vector.multi_reduction <add>, %62, %cst_36 [0] : vector<2x32xf32> to vector<32xf32>
    %64 = vector.shape_cast %63 : vector<32xf32> to vector<1x32xf32>
    %65 = vector.broadcast %64 : vector<1x32xf32> to vector<2x32xf32>
    %66 = arith.divf %62, %65 : vector<2x32xf32>
    %c0_37 = arith.constant 0 : index
    %c0_38 = arith.constant 0 : index
    %67 = vector.load %arg2[%c0_37, %c0_38] : memref<32x512xf32, #tpu.memory_space<vmem>>, vector<32x512xf32>
    %cst_39 = arith.constant dense<0.000000e+00> : vector<2x512xf32>
    %68 = tpu.matmul %66, %67, %cst_39 {dimension_numbers = #tpu.dot_dimension_numbers<[1], [0], [0], [1], [0, 0, 1, 1], [], []>} : vector<2x32xf32>, vector<32x512xf32>, vector<2x512xf32> -> vector<2x512xf32>
    %69 = arith.mulf %68, %2 : vector<2x512xf32>
    %c0_40 = arith.constant 0 : index
    %c0_41 = arith.constant 0 : index
    %70 = vector.load %arg4[%c0_40, %c0_41] : memref<512x64xf32, #tpu.memory_space<vmem>>, vector<512x64xf32>
    %cst_42 = arith.constant dense<0.000000e+00> : vector<2x64xf32>
    %71 = tpu.matmul %69, %70, %cst_42 {dimension_numbers = #tpu.dot_dimension_numbers<[1], [0], [0], [1], [0, 0, 1, 1], [], []>} : vector<2x512xf32>, vector<512x64xf32>, vector<2x64xf32> -> vector<2x64xf32>
    %72 = arith.mulf %71, %71 : vector<2x64xf32>
    %73 = vector.shape_cast %72 : vector<2x64xf32> to vector<1x2x64xf32>
    %cst_43 = arith.constant dense<0.000000e+00> : vector<1xf32>
    %74 = vector.multi_reduction <add>, %73, %cst_43 [1, 2] : vector<1x2x64xf32> to vector<1xf32>
    %75 = vector.shape_cast %74 : vector<1xf32> to vector<1x1x1xf32>
    %76 = vector.extract %75[0, 0, 0] : f32 from vector<1x1x1xf32>
    %77 = math.rsqrt %76 : f32
    %78 = arith.mulf %76, %77 : f32
    %cst_44 = arith.constant 1.000000e+00 : f32
    %79 = arith.addf %cst_44, %76 : f32
    %80 = arith.divf %78, %79 : f32
    %81 = vector.broadcast %80 : f32 to vector<2x64xf32>
    %82 = arith.mulf %71, %81 : vector<2x64xf32>
    %c0_45 = arith.constant 0 : index
    %c0_46 = arith.constant 0 : index
    %83 = vector.load %arg6[%c0_45, %c0_46] : memref<2x64xf32, #tpu.memory_space<vmem>>, vector<2x64xf32>
    tpu.vector_store %arg6[%c0_45, %c0_46], %82 {strides = array<i32>} : memref<2x64xf32, #tpu.memory_space<vmem>>, vector<2x64xf32>,
    return
  }
}

</mosaic_0001>

<llo_original>
// kernel: digitcaps_forward.1
$region0: #{digitcaps_forward.1}
  #allocation0 [shape = 'u32[]', space=smem, size = 0x4, offset = 0x4, fixed_abs, tag = 'smem constant byte address 0x4 - core index']
  #allocation1 [shape = 'u32[144,128]{1,0:T(1,128)}', space=vmem, size = 0x12000, scoped, tag = 'internal scratch']
  %s0 = inlined_call_operand.vmem [shape: f32[2,64], index: 0, kind: input, shape index: {}]
  %s1 = inlined_call_operand.vmem [shape: f32[64,512], index: 1, kind: input, shape index: {}]
  %s2 = inlined_call_operand.vmem [shape: f32[32,512], index: 2, kind: input, shape index: {}]
  %s3 = inlined_call_operand.vmem [shape: f32[512,32], index: 3, kind: input, shape index: {}]
  %s4 = inlined_call_operand.vmem [shape: f32[512,64], index: 4, kind: input, shape index: {}]
  %s5 = inlined_call_operand.vmem [shape: f32[64,512], index: 5, kind: input, shape index: {}]
  %s6 = inlined_call_operand.vmem [shape: f32[2,64], index: 6, kind: output, shape index: {}]
  %s7 = sld [smem:[#allocation0]]
  $region34: #{digitcaps_forward.1} parent=0
    _
  %s9 = ssub.s32 1, %s7
  %s10 = scalar_select 0, %s9, %s7
  // Predicated region
  $region2: #{digitcaps_forward.1} parent=0 // pred_check
    _
  $region3: #{digitcaps_forward.1} parent=0 // pred_check_branch
    %12 = sbr.rel (0) target = $region5
  $region4: #{digitcaps_forward.1} parent=0 // pred_region
    _
  $region5: #{digitcaps_forward.1} parent=0 // pred_fallthru
    _
  // Predicated region
  $region6: #{digitcaps_forward.1} parent=0 // pred_check
    _
  $region7: #{digitcaps_forward.1} parent=0 // pred_check_branch
    %14 = sbr.rel (0) target = $region9
  $region8: #{digitcaps_forward.1} parent=0 // pred_region
    _
  $region9: #{digitcaps_forward.1} parent=0 // pred_fallthru
    _
  // Predicated region
  $region10: #{digitcaps_forward.1} parent=0 // pred_check
    _
  $region11: #{digitcaps_forward.1} parent=0 // pred_check_branch
    %16 = sbr.rel (0) target = $region13
  $region12: #{digitcaps_forward.1} parent=0 // pred_region
    _
  $region13: #{digitcaps_forward.1} parent=0 // pred_fallthru
    _
  // Predicated region
  $region14: #{digitcaps_forward.1} parent=0 // pred_check
    _
  $region15: #{digitcaps_forward.1} parent=0 // pred_check_branch
    %18 = sbr.rel (0) target = $region17
  $region16: #{digitcaps_forward.1} parent=0 // pred_region
    _
  $region17: #{digitcaps_forward.1} parent=0 // pred_fallthru
    _
  // Predicated region
  $region18: #{digitcaps_forward.1} parent=0 // pred_check
    _
  $region19: #{digitcaps_forward.1} parent=0 // pred_check_branch
    %20 = sbr.rel (0) target = $region21
  $region20: #{digitcaps_forward.1} parent=0 // pred_region
    _
  $region21: #{digitcaps_forward.1} parent=0 // pred_fallthru
    _
  // Predicated region
  $region22: #{digitcaps_forward.1} parent=0 // pred_check
    _
  $region23: #{digitcaps_forward.1} parent=0 // pred_check_branch
    %22 = sbr.rel (0) target = $region25
  $region24: #{digitcaps_forward.1} parent=0 // pred_region
    _
  $region25: #{digitcaps_forward.1} parent=0 // pred_fallthru
    _
  %v23 = vld [vmem:[%s0] sm:$0x3]
  %v24 = vld [vmem:[%s1] sm:$0xff]
  %v25 = vld [vmem:[%s1 + $0x8] sm:$0xff]
  %v26 = vld [vmem:[%s1 + $0x10] sm:$0xff]
  %v27 = vld [vmem:[%s1 + $0x18] sm:$0xff]
  %v28 = vld [vmem:[%s1 + $0x20] sm:$0xff]
  %v29 = vld [vmem:[%s1 + $0x28] sm:$0xff]
  %v30 = vld [vmem:[%s1 + $0x30] sm:$0xff]
  %v31 = vld [vmem:[%s1 + $0x38] sm:$0xff]
  %v32 = vld [vmem:[%s1 + $0x40] sm:$0xff]
  %v33 = vld [vmem:[%s1 + $0x48] sm:$0xff]
  %v34 = vld [vmem:[%s1 + $0x50] sm:$0xff]
  %v35 = vld [vmem:[%s1 + $0x58] sm:$0xff]
  %v36 = vld [vmem:[%s1 + $0x60] sm:$0xff]
  %v37 = vld [vmem:[%s1 + $0x68] sm:$0xff]
  %v38 = vld [vmem:[%s1 + $0x70] sm:$0xff]
  %v39 = vld [vmem:[%s1 + $0x78] sm:$0xff]
  %v40 = vld [vmem:[%s1 + $0x80] sm:$0xff]
  %v41 = vld [vmem:[%s1 + $0x88] sm:$0xff]
  %v42 = vld [vmem:[%s1 + $0x90] sm:$0xff]
  %v43 = vld [vmem:[%s1 + $0x98] sm:$0xff]
  %v44 = vld [vmem:[%s1 + $0xa0] sm:$0xff]
  %v45 = vld [vmem:[%s1 + $0xa8] sm:$0xff]
  %v46 = vld [vmem:[%s1 + $0xb0] sm:$0xff]
  %v47 = vld [vmem:[%s1 + $0xb8] sm:$0xff]
  %v48 = vld [vmem:[%s1 + $0xc0] sm:$0xff]
  %v49 = vld [vmem:[%s1 + $0xc8] sm:$0xff]
  %v50 = vld [vmem:[%s1 + $0xd0] sm:$0xff]
  %v51 = vld [vmem:[%s1 + $0xd8] sm:$0xff]
  %v52 = vld [vmem:[%s1 + $0xe0] sm:$0xff]
  %v53 = vld [vmem:[%s1 + $0xe8] sm:$0xff]
  %v54 = vld [vmem:[%s1 + $0xf0] sm:$0xff]
  %v55 = vld [vmem:[%s1 + $0xf8] sm:$0xff]
  %vm56 = vcmask 523264
  %v58 = vsel %vm56, %v23, 0
  %60 = vmatprep.subr.mxu0 0.0
  %61 = vmatpush1.msra.mxu0 0.0
  %62 = vmatprep.subr.mxu0 0.0
  %63 = vmatpush1.msra.mxu0 0.0
  %64 = vmatprep.subr.mxu0 0.0
  %65 = vmatpush1.msra.mxu0 0.0
  %66 = vmatprep.subr.mxu0 0.0
  %67 = vmatpush1.msra.mxu0 0.0
  %68 = vmatprep.subr.mxu0 0.0
  %69 = vmatpush1.msra.mxu0 0.0
  %70 = vmatprep.subr.mxu0 0.0
  %71 = vmatpush1.msra.mxu0 0.0
  %72 = vmatprep.subr.mxu0 0.0
  %73 = vmatpush1.msra.mxu0 0.0
  %74 = vmatprep.subr.mxu0 0.0
  %75 = vmatpush1.msra.mxu0 0.0
  %76 = vmatprep.subr.mxu0 %v53
  %77 = vmatpush1.msra.mxu0 %v52
  %78 = vmatprep.subr.mxu0 %v49
  %79 = vmatpush1.msra.mxu0 %v48
  %80 = vmatprep.subr.mxu0 %v45
  %81 = vmatpush1.msra.mxu0 %v44
  %82 = vmatprep.subr.mxu0 %v41
  %83 = vmatpush1.msra.mxu0 %v40
  %84 = vmatprep.subr.mxu0 %v37
  %85 = vmatpush1.msra.mxu0 %v36
  %86 = vmatprep.subr.mxu0 %v33
  %87 = vmatpush1.msra.mxu0 %v32
  %88 = vmatprep.subr.mxu0 %v29
  %89 = vmatpush1.msra.mxu0 %v28
  %90 = vmatprep.subr.mxu0 %v25
  %91 = vmatpush1.msra.mxu0 %v24
  %92 = vmatprep.subr.mxu0 0.0
  %93 = vmatpush2.msra.mxu0 0.0
  %94 = vmatprep.subr.mxu0 0.0
  %95 = vmatpush2.msra.mxu0 0.0
  %96 = vmatprep.subr.mxu0 0.0
  %97 = vmatpush2.msra.mxu0 0.0
  %98 = vmatprep.subr.mxu0 0.0
  %99 = vmatpush2.msra.mxu0 0.0
  %100 = vmatprep.subr.mxu0 0.0
  %101 = vmatpush2.msra.mxu0 0.0
  %102 = vmatprep.subr.mxu0 0.0
  %103 = vmatpush2.msra.mxu0 0.0
  %104 = vmatprep.subr.mxu0 0.0
  %105 = vmatpush2.msra.mxu0 0.0
  %106 = vmatprep.subr.mxu0 0.0
  %107 = vmatpush2.msra.mxu0 0.0
  %108 = vmatprep.subr.mxu0 0.0
  %109 = vmatpush2.msra.mxu0 0.0
  %110 = vmatprep.subr.mxu0 0.0
  %111 = vmatpush2.msra.mxu0 0.0
  %112 = vmatprep.subr.mxu0 0.0
  %113 = vmatpush2.msra.mxu0 0.0
  %114 = vmatprep.subr.mxu0 0.0
  %115 = vmatpush2.msra.mxu0 0.0
  %116 = vmatprep.subr.mxu0 0.0
  %117 = vmatpush2.msra.mxu0 0.0
  %118 = vmatprep.subr.mxu0 0.0
  %119 = vmatpush2.msra.mxu0 0.0
  %120 = vmatprep.subr.mxu0 0.0
  %121 = vmatpush2.msra.mxu0 0.0
  %122 = vmatprep.subr.mxu0 0.0
  %123 = vmatpush2.msra.mxu0 0.0
  %124 = vmatprep.mubr.f32.mxu0 0.0
  %125 = vmatmul.mubr.f32.gmra.mxu0 %v58
  %v126 = vpop.f32.mrf.mxu0
  %v127 = vadd.f32 0.0, %v126
  %v128 = vpop.f32.mrf.mxu0
  %v129 = vadd.f32 0.0, %v128
  %130 = vdwg.mxu0
  %131 = vmatprep.subr.mxu0 0.0
  %132 = vmatpush1.msra.mxu0 0.0
  %133 = vmatprep.subr.mxu0 0.0
  %134 = vmatpush1.msra.mxu0 0.0
  %135 = vmatprep.subr.mxu0 0.0
  %136 = vmatpush1.msra.mxu0 0.0
  %137 = vmatprep.subr.mxu0 0.0
  %138 = vmatpush1.msra.mxu0 0.0
  %139 = vmatprep.subr.mxu0 0.0
  %140 = vmatpush1.msra.mxu0 0.0
  %141 = vmatprep.subr.mxu0 0.0
  %142 = vmatpush1.msra.mxu0 0.0
  %143 = vmatprep.subr.mxu0 0.0
  %144 = vmatpush1.msra.mxu0 0.0
  %145 = vmatprep.subr.mxu0 0.0
  %146 = vmatpush1.msra.mxu0 0.0
  %147 = vmatprep.subr.mxu0 %v55
  %148 = vmatpush1.msra.mxu0 %v54
  %149 = vmatprep.subr.mxu0 %v51
  %150 = vmatpush1.msra.mxu0 %v50
  %151 = vmatprep.subr.mxu0 %v47
  %152 = vmatpush1.msra.mxu0 %v46
  %153 = vmatprep.subr.mxu0 %v43
  %154 = vmatpush1.msra.mxu0 %v42
  %155 = vmatprep.subr.mxu0 %v39
  %156 = vmatpush1.msra.mxu0 %v38
  %157 = vmatprep.subr.mxu0 %v35
  %158 = vmatpush1.msra.mxu0 %v34
  %159 = vmatprep.subr.mxu0 %v31
  %160 = vmatpush1.msra.mxu0 %v30
  %161 = vmatprep.subr.mxu0 %v27
  %162 = vmatpush1.msra.mxu0 %v26
  %163 = vmatprep.subr.mxu0 0.0
  %164 = vmatpush2.msra.mxu0 0.0
  %165 = vmatprep.subr.mxu0 0.0
  %166 = vmatpush2.msra.mxu0 0.0
  %167 = vmatprep.subr.mxu0 0.0
  %168 = vmatpush2.msra.mxu0 0.0
  %169 = vmatprep.subr.mxu0 0.0
  %170 = vmatpush2.msra.mxu0 0.0
  %171 = vmatprep.subr.mxu0 0.0
  %172 = vmatpush2.msra.mxu0 0.0
  %173 = vmatprep.subr.mxu0 0.0
  %174 = vmatpush2.msra.mxu0 0.0
  %175 = vmatprep.subr.mxu0 0.0
  %176 = vmatpush2.msra.mxu0 0.0
  %177 = vmatprep.subr.mxu0 0.0
  %178 = vmatpush2.msra.mxu0 0.0
  %179 = vmatprep.subr.mxu0 0.0
  %180 = vmatpush2.msra.mxu0 0.0
  %181 = vmatprep.subr.mxu0 0.0
  %182 = vmatpush2.msra.mxu0 0.0
  %183 = vmatprep.subr.mxu0 0.0
  %184 = vmatpush2.msra.mxu0 0.0
  %185 = vmatprep.subr.mxu0 0.0
  %186 = vmatpush2.msra.mxu0 0.0
  %187 = vmatprep.subr.mxu0 0.0
  %188 = vmatpush2.msra.mxu0 0.0
  %189 = vmatprep.subr.mxu0 0.0
  %190 = vmatpush2.msra.mxu0 0.0
  %191 = vmatprep.subr.mxu0 0.0
  %192 = vmatpush2.msra.mxu0 0.0
  %193 = vmatprep.subr.mxu0 0.0
  %194 = vmatpush2.msra.mxu0 0.0
  %195 = vmatprep.mubr.f32.mxu0 0.0
  %196 = vmatmul.mubr.f32.gmra.mxu0 %v58
  %v197 = vpop.f32.mrf.mxu0
  %v198 = vadd.f32 0.0, %v197
  %v199 = vpop.f32.mrf.mxu0
  %v200 = vadd.f32 0.0, %v199
  %201 = vdwg.mxu0
  %v202 = vld [vmem:[%s2] sm:$0xff]
  %v203 = vld [vmem:[%s2 + $0x8] sm:$0xff]
  %v204 = vld [vmem:[%s2 + $0x10] sm:$0xff]
  %v205 = vld [vmem:[%s2 + $0x18] sm:$0xff]
  %v206 = vld [vmem:[%s2 + $0x20] sm:$0xff]
  %v207 = vld [vmem:[%s2 + $0x28] sm:$0xff]
  %v208 = vld [vmem:[%s2 + $0x30] sm:$0xff]
  %v209 = vld [vmem:[%s2 + $0x38] sm:$0xff]
  %v210 = vld [vmem:[%s2 + $0x40] sm:$0xff]
  %v211 = vld [vmem:[%s2 + $0x48] sm:$0xff]
  %v212 = vld [vmem:[%s2 + $0x50] sm:$0xff]
  %v213 = vld [vmem:[%s2 + $0x58] sm:$0xff]
  %v214 = vld [vmem:[%s2 + $0x60] sm:$0xff]
  %v215 = vld [vmem:[%s2 + $0x68] sm:$0xff]
  %v216 = vld [vmem:[%s2 + $0x70] sm:$0xff]
  %v217 = vld [vmem:[%s2 + $0x78] sm:$0xff]
  %vm218 = vcmask 261120
  %v220 = vsel %vm218, 0.5, 0
  %222 = vmatprep.subr.mxu0 0.0
  %223 = vmatpush1.msra.mxu0 0.0
  %224 = vmatprep.subr.mxu0 0.0
  %225 = vmatpush1.msra.mxu0 0.0
  %226 = vmatprep.subr.mxu0 0.0
  %227 = vmatpush1.msra.mxu0 0.0
  %228 = vmatprep.subr.mxu0 0.0
  %229 = vmatpush1.msra.mxu0 0.0
  %230 = vmatprep.subr.mxu0 0.0
  %231 = vmatpush1.msra.mxu0 0.0
  %232 = vmatprep.subr.mxu0 0.0
  %233 = vmatpush1.msra.mxu0 0.0
  %234 = vmatprep.subr.mxu0 0.0
  %235 = vmatpush1.msra.mxu0 0.0
  %236 = vmatprep.subr.mxu0 0.0
  %237 = vmatpush1.msra.mxu0 0.0
  %238 = vmatprep.subr.mxu0 0.0
  %239 = vmatpush1.msra.mxu0 0.0
  %240 = vmatprep.subr.mxu0 0.0
  %241 = vmatpush1.msra.mxu0 0.0
  %242 = vmatprep.subr.mxu0 0.0
  %243 = vmatpush1.msra.mxu0 0.0
  %244 = vmatprep.subr.mxu0 0.0
  %245 = vmatpush1.msra.mxu0 0.0
  %246 = vmatprep.subr.mxu0 %v215
  %247 = vmatpush1.msra.mxu0 %v214
  %248 = vmatprep.subr.mxu0 %v211
  %249 = vmatpush1.msra.mxu0 %v210
  %250 = vmatprep.subr.mxu0 %v207
  %251 = vmatpush1.msra.mxu0 %v206
  %252 = vmatprep.subr.mxu0 %v203
  %253 = vmatpush1.msra.mxu0 %v202
  %254 = vmatprep.subr.mxu0 0.0
  %255 = vmatpush2.msra.mxu0 0.0
  %256 = vmatprep.subr.mxu0 0.0
  %257 = vmatpush2.msra.mxu0 0.0
  %258 = vmatprep.subr.mxu0 0.0
  %259 = vmatpush2.msra.mxu0 0.0
  %260 = vmatprep.subr.mxu0 0.0
  %261 = vmatpush2.msra.mxu0 0.0
  %262 = vmatprep.subr.mxu0 0.0
  %263 = vmatpush2.msra.mxu0 0.0
  %264 = vmatprep.subr.mxu0 0.0
  %265 = vmatpush2.msra.mxu0 0.0
  %266 = vmatprep.subr.mxu0 0.0
  %267 = vmatpush2.msra.mxu0 0.0
  %268 = vmatprep.subr.mxu0 0.0
  %269 = vmatpush2.msra.mxu0 0.0
  %270 = vmatprep.subr.mxu0 0.0
  %271 = vmatpush2.msra.mxu0 0.0
  %272 = vmatprep.subr.mxu0 0.0
  %273 = vmatpush2.msra.mxu0 0.0
  %274 = vmatprep.subr.mxu0 0.0
  %275 = vmatpush2.msra.mxu0 0.0
  %276 = vmatprep.subr.mxu0 0.0
  %277 = vmatpush2.msra.mxu0 0.0
  %278 = vmatprep.subr.mxu0 0.0
  %279 = vmatpush2.msra.mxu0 0.0
  %280 = vmatprep.subr.mxu0 0.0
  %281 = vmatpush2.msra.mxu0 0.0
  %282 = vmatprep.subr.mxu0 0.0
  %283 = vmatpush2.msra.mxu0 0.0
  %284 = vmatprep.subr.mxu0 0.0
  %285 = vmatpush2.msra.mxu0 0.0
  %286 = vmatprep.mubr.f32.mxu0 0.0
  %287 = vmatmul.mubr.f32.gmra.mxu0 %v220
  %v288 = vpop.f32.mrf.mxu0
  %v289 = vadd.f32 0.0, %v288
  %v290 = vpop.f32.mrf.mxu0
  %v291 = vadd.f32 0.0, %v290
  %292 = vdwg.mxu0
  %293 = vmatprep.subr.mxu0 0.0
  %294 = vmatpush1.msra.mxu0 0.0
  %295 = vmatprep.subr.mxu0 0.0
  %296 = vmatpush1.msra.mxu0 0.0
  %297 = vmatprep.subr.mxu0 0.0
  %298 = vmatpush1.msra.mxu0 0.0
  %299 = vmatprep.subr.mxu0 0.0
  %300 = vmatpush1.msra.mxu0 0.0
  %301 = vmatprep.subr.mxu0 0.0
  %302 = vmatpush1.msra.mxu0 0.0
  %303 = vmatprep.subr.mxu0 0.0
  %304 = vmatpush1.msra.mxu0 0.0
  %305 = vmatprep.subr.mxu0 0.0
  %306 = vmatpush1.msra.mxu0 0.0
  %307 = vmatprep.subr.mxu0 0.0
  %308 = vmatpush1.msra.mxu0 0.0
  %309 = vmatprep.subr.mxu0 0.0
  %310 = vmatpush1.msra.mxu0 0.0
  %311 = vmatprep.subr.mxu0 0.0
  %312 = vmatpush1.msra.mxu0 0.0
  %313 = vmatprep.subr.mxu0 0.0
  %314 = vmatpush1.msra.mxu0 0.0
  %315 = vmatprep.subr.mxu0 0.0
  %316 = vmatpush1.msra.mxu0 0.0
  %317 = vmatprep.subr.mxu0 %v217
  %318 = vmatpush1.msra.mxu0 %v216
  %319 = vmatprep.subr.mxu0 %v213
  %320 = vmatpush1.msra.mxu0 %v212
  %321 = vmatprep.subr.mxu0 %v209
  %322 = vmatpush1.msra.mxu0 %v208
  %323 = vmatprep.subr.mxu0 %v205
  %324 = vmatpush1.msra.mxu0 %v204
  %325 = vmatprep.subr.mxu0 0.0
  %326 = vmatpush2.msra.mxu0 0.0
  %327 = vmatprep.subr.mxu0 0.0
  %328 = vmatpush2.msra.mxu0 0.0
  %329 = vmatprep.subr.mxu0 0.0
  %330 = vmatpush2.msra.mxu0 0.0
  %331 = vmatprep.subr.mxu0 0.0
  %332 = vmatpush2.msra.mxu0 0.0
  %333 = vmatprep.subr.mxu0 0.0
  %334 = vmatpush2.msra.mxu0 0.0
  %335 = vmatprep.subr.mxu0 0.0
  %336 = vmatpush2.msra.mxu0 0.0
  %337 = vmatprep.subr.mxu0 0.0
  %338 = vmatpush2.msra.mxu0 0.0
  %339 = vmatprep.subr.mxu0 0.0
  %340 = vmatpush2.msra.mxu0 0.0
  %341 = vmatprep.subr.mxu0 0.0
  %342 = vmatpush2.msra.mxu0 0.0
  %343 = vmatprep.subr.mxu0 0.0
  %344 = vmatpush2.msra.mxu0 0.0
  %345 = vmatprep.subr.mxu0 0.0
  %346 = vmatpush2.msra.mxu0 0.0
  %347 = vmatprep.subr.mxu0 0.0
  %348 = vmatpush2.msra.mxu0 0.0
  %349 = vmatprep.subr.mxu0 0.0
  %350 = vmatpush2.msra.mxu0 0.0
  %351 = vmatprep.subr.mxu0 0.0
  %352 = vmatpush2.msra.mxu0 0.0
  %353 = vmatprep.subr.mxu0 0.0
  %354 = vmatpush2.msra.mxu0 0.0
  %355 = vmatprep.subr.mxu0 0.0
  %356 = vmatpush2.msra.mxu0 0.0
  %357 = vmatprep.mubr.f32.mxu0 0.0
  %358 = vmatmul.mubr.f32.gmra.mxu0 %v220
  %v359 = vpop.f32.mrf.mxu0
  %v360 = vadd.f32 0.0, %v359
  %v361 = vpop.f32.mrf.mxu0
  %v362 = vadd.f32 0.0, %v361
  %363 = vdwg.mxu0
  %v364 = vmul.f32 %v289, %v127
  %v365 = vmul.f32 %v291, %v129
  %v366 = vmul.f32 %v360, %v198
  %v367 = vmul.f32 %v362, %v200
  %v368 = vld [vmem:[%s4] sm:$0xff]
  %v369 = vld [vmem:[%s4 + $0x8] sm:$0xff]
  %v370 = vld [vmem:[%s4 + $0x10] sm:$0xff]
  %v371 = vld [vmem:[%s4 + $0x18] sm:$0xff]
  %v372 = vld [vmem:[%s4 + $0x20] sm:$0xff]
  %v373 = vld [vmem:[%s4 + $0x28] sm:$0xff]
  %v374 = vld [vmem:[%s4 + $0x30] sm:$0xff]
  %v375 = vld [vmem:[%s4 + $0x38] sm:$0xff]
  %v376 = vld [vmem:[%s4 + $0x40] sm:$0xff]
  %v377 = vld [vmem:[%s4 + $0x48] sm:$0xff]
  %v378 = vld [vmem:[%s4 + $0x50] sm:$0xff]
  %v379 = vld [vmem:[%s4 + $0x58] sm:$0xff]
  %v380 = vld [vmem:[%s4 + $0x60] sm:$0xff]
  %v381 = vld [vmem:[%s4 + $0x68] sm:$0xff]
  %v382 = vld [vmem:[%s4 + $0x70] sm:$0xff]
  %v383 = vld [vmem:[%s4 + $0x78] sm:$0xff]
  %v384 = vld [vmem:[%s4 + $0x80] sm:$0xff]
  %v385 = vld [vmem:[%s4 + $0x88] sm:$0xff]
  %v386 = vld [vmem:[%s4 + $0x90] sm:$0xff]
  %v387 = vld [vmem:[%s4 + $0x98] sm:$0xff]
  %v388 = vld [vmem:[%s4 + $0xa0] sm:$0xff]
  %v389 = vld [vmem:[%s4 + $0xa8] sm:$0xff]
  %v390 = vld [vmem:[%s4 + $0xb0] sm:$0xff]
  %v391 = vld [vmem:[%s4 + $0xb8] sm:$0xff]
  %v392 = vld [vmem:[%s4 + $0xc0] sm:$0xff]
  %v393 = vld [vmem:[%s4 + $0xc8] sm:$0xff]
  %v394 = vld [vmem:[%s4 + $0xd0] sm:$0xff]
  %v395 = vld [vmem:[%s4 + $0xd8] sm:$0xff]
  %v396 = vld [vmem:[%s4 + $0xe0] sm:$0xff]
  %v397 = vld [vmem:[%s4 + $0xe8] sm:$0xff]
  %v398 = vld [vmem:[%s4 + $0xf0] sm:$0xff]
  %v399 = vld [vmem:[%s4 + $0xf8] sm:$0xff]
  %v400 = vld [vmem:[%s4 + $0x100] sm:$0xff]
  %v401 = vld [vmem:[%s4 + $0x108] sm:$0xff]
  %v402 = vld [vmem:[%s4 + $0x110] sm:$0xff]
  %v403 = vld [vmem:[%s4 + $0x118] sm:$0xff]
  %v404 = vld [vmem:[%s4 + $0x120] sm:$0xff]
  %v405 = vld [vmem:[%s4 + $0x128] sm:$0xff]
  %v406 = vld [vmem:[%s4 + $0x130] sm:$0xff]
  %v407 = vld [vmem:[%s4 + $0x138] sm:$0xff]
  %v408 = vld [vmem:[%s4 + $0x140] sm:$0xff]
  %v409 = vld [vmem:[%s4 + $0x148] sm:$0xff]
  %v410 = vld [vmem:[%s4 + $0x150] sm:$0xff]
  %v411 = vld [vmem:[%s4 + $0x158] sm:$0xff]
  %v412 = vld [vmem:[%s4 + $0x160] sm:$0xff]
  %v413 = vld [vmem:[%s4 + $0x168] sm:$0xff]
  %v414 = vld [vmem:[%s4 + $0x170] sm:$0xff]
  %v415 = vld [vmem:[%s4 + $0x178] sm:$0xff]
  %v416 = vld [vmem:[%s4 + $0x180] sm:$0xff]
  %v417 = vld [vmem:[%s4 + $0x188] sm:$0xff]
  %v418 = vld [vmem:[%s4 + $0x190] sm:$0xff]
  %v419 = vld [vmem:[%s4 + $0x198] sm:$0xff]
  %v420 = vld [vmem:[%s4 + $0x1a0] sm:$0xff]
  %v421 = vld [vmem:[%s4 + $0x1a8] sm:$0xff]
  %v422 = vld [vmem:[%s4 + $0x1b0] sm:$0xff]
  %v423 = vld [vmem:[%s4 + $0x1b8] sm:$0xff]
  %v424 = vld [vmem:[%s4 + $0x1c0] sm:$0xff]
  %v425 = vld [vmem:[%s4 + $0x1c8] sm:$0xff]
  %v426 = vld [vmem:[%s4 + $0x1d0] sm:$0xff]
  %v427 = vld [vmem:[%s4 + $0x1d8] sm:$0xff]
  %v428 = vld [vmem:[%s4 + $0x1e0] sm:$0xff]
  %v429 = vld [vmem:[%s4 + $0x1e8] sm:$0xff]
  %v430 = vld [vmem:[%s4 + $0x1f0] sm:$0xff]
  %v431 = vld [vmem:[%s4 + $0x1f8] sm:$0xff]
  %432 = vmatprep.subr.mxu0 0.0
  %433 = vmatpush1.msra.mxu0 %v383
  %434 = vmatprep.subr.mxu0 0.0
  %435 = vmatpush1.msra.mxu0 %v382
  %436 = vmatprep.subr.mxu0 0.0
  %437 = vmatpush1.msra.mxu0 %v381
  %438 = vmatprep.subr.mxu0 0.0
  %439 = vmatpush1.msra.mxu0 %v380
  %440 = vmatprep.subr.mxu0 0.0
  %441 = vmatpush1.msra.mxu0 %v379
  %442 = vmatprep.subr.mxu0 0.0
  %443 = vmatpush1.msra.mxu0 %v378
  %444 = vmatprep.subr.mxu0 0.0
  %445 = vmatpush1.msra.mxu0 %v377
  %446 = vmatprep.subr.mxu0 0.0
  %447 = vmatpush1.msra.mxu0 %v376
  %448 = vmatprep.subr.mxu0 0.0
  %449 = vmatpush1.msra.mxu0 %v375
  %450 = vmatprep.subr.mxu0 0.0
  %451 = vmatpush1.msra.mxu0 %v374
  %452 = vmatprep.subr.mxu0 0.0
  %453 = vmatpush1.msra.mxu0 %v373
  %454 = vmatprep.subr.mxu0 0.0
  %455 = vmatpush1.msra.mxu0 %v372
  %456 = vmatprep.subr.mxu0 0.0
  %457 = vmatpush1.msra.mxu0 %v371
  %458 = vmatprep.subr.mxu0 0.0
  %459 = vmatpush1.msra.mxu0 %v370
  %460 = vmatprep.subr.mxu0 0.0
  %461 = vmatpush1.msra.mxu0 %v369
  %462 = vmatprep.subr.mxu0 0.0
  %463 = vmatpush1.msra.mxu0 %v368
  %464 = vmatprep.subr.mxu0 0.0
  %465 = vmatpush2.msra.mxu0 %v399
  %466 = vmatprep.subr.mxu0 0.0
  %467 = vmatpush2.msra.mxu0 %v398
  %468 = vmatprep.subr.mxu0 0.0
  %469 = vmatpush2.msra.mxu0 %v397
  %470 = vmatprep.subr.mxu0 0.0
  %471 = vmatpush2.msra.mxu0 %v396
  %472 = vmatprep.subr.mxu0 0.0
  %473 = vmatpush2.msra.mxu0 %v395
  %474 = vmatprep.subr.mxu0 0.0
  %475 = vmatpush2.msra.mxu0 %v394
  %476 = vmatprep.subr.mxu0 0.0
  %477 = vmatpush2.msra.mxu0 %v393
  %478 = vmatprep.subr.mxu0 0.0
  %479 = vmatpush2.msra.mxu0 %v392
  %480 = vmatprep.subr.mxu0 0.0
  %481 = vmatpush2.msra.mxu0 %v391
  %482 = vmatprep.subr.mxu0 0.0
  %483 = vmatpush2.msra.mxu0 %v390
  %484 = vmatprep.subr.mxu0 0.0
  %485 = vmatpush2.msra.mxu0 %v389
  %486 = vmatprep.subr.mxu0 0.0
  %487 = vmatpush2.msra.mxu0 %v388
  %488 = vmatprep.subr.mxu0 0.0
  %489 = vmatpush2.msra.mxu0 %v387
  %490 = vmatprep.subr.mxu0 0.0
  %491 = vmatpush2.msra.mxu0 %v386
  %492 = vmatprep.subr.mxu0 0.0
  %493 = vmatpush2.msra.mxu0 %v385
  %494 = vmatprep.subr.mxu0 0.0
  %495 = vmatpush2.msra.mxu0 %v384
  %496 = vmatprep.mubr.f32.mxu0 %v365
  %497 = vmatmul.mubr.f32.gmra.mxu0 %v364
  %v498 = vpop.f32.mrf.mxu0
  %v499 = vadd.f32 0.0, %v498
  %v500 = vpop.f32.mrf.mxu0
  %501 = vdwg.mxu0
  %502 = vmatprep.subr.mxu0 0.0
  %503 = vmatpush1.msra.mxu0 %v415
  %504 = vmatprep.subr.mxu0 0.0
  %505 = vmatpush1.msra.mxu0 %v414
  %506 = vmatprep.subr.mxu0 0.0
  %507 = vmatpush1.msra.mxu0 %v413
  %508 = vmatprep.subr.mxu0 0.0
  %509 = vmatpush1.msra.mxu0 %v412
  %510 = vmatprep.subr.mxu0 0.0
  %511 = vmatpush1.msra.mxu0 %v411
  %512 = vmatprep.subr.mxu0 0.0
  %513 = vmatpush1.msra.mxu0 %v410
  %514 = vmatprep.subr.mxu0 0.0
  %515 = vmatpush1.msra.mxu0 %v409
  %516 = vmatprep.subr.mxu0 0.0
  %517 = vmatpush1.msra.mxu0 %v408
  %518 = vmatprep.subr.mxu0 0.0
  %519 = vmatpush1.msra.mxu0 %v407
  %520 = vmatprep.subr.mxu0 0.0
  %521 = vmatpush1.msra.mxu0 %v406
  %522 = vmatprep.subr.mxu0 0.0
  %523 = vmatpush1.msra.mxu0 %v405
  %524 = vmatprep.subr.mxu0 0.0
  %525 = vmatpush1.msra.mxu0 %v404
  %526 = vmatprep.subr.mxu0 0.0
  %527 = vmatpush1.msra.mxu0 %v403
  %528 = vmatprep.subr.mxu0 0.0
  %529 = vmatpush1.msra.mxu0 %v402
  %530 = vmatprep.subr.mxu0 0.0
  %531 = vmatpush1.msra.mxu0 %v401
  %532 = vmatprep.subr.mxu0 0.0
  %533 = vmatpush1.msra.mxu0 %v400
  %534 = vmatprep.subr.mxu0 0.0
  %535 = vmatpush2.msra.mxu0 %v431
  %536 = vmatprep.subr.mxu0 0.0
  %537 = vmatpush2.msra.mxu0 %v430
  %538 = vmatprep.subr.mxu0 0.0
  %539 = vmatpush2.msra.mxu0 %v429
  %540 = vmatprep.subr.mxu0 0.0
  %541 = vmatpush2.msra.mxu0 %v428
  %542 = vmatprep.subr.mxu0 0.0
  %543 = vmatpush2.msra.mxu0 %v427
  %544 = vmatprep.subr.mxu0 0.0
  %545 = vmatpush2.msra.mxu0 %v426
  %546 = vmatprep.subr.mxu0 0.0
  %547 = vmatpush2.msra.mxu0 %v425
  %548 = vmatprep.subr.mxu0 0.0
  %549 = vmatpush2.msra.mxu0 %v424
  %550 = vmatprep.subr.mxu0 0.0
  %551 = vmatpush2.msra.mxu0 %v423
  %552 = vmatprep.subr.mxu0 0.0
  %553 = vmatpush2.msra.mxu0 %v422
  %554 = vmatprep.subr.mxu0 0.0
  %555 = vmatpush2.msra.mxu0 %v421
  %556 = vmatprep.subr.mxu0 0.0
  %557 = vmatpush2.msra.mxu0 %v420
  %558 = vmatprep.subr.mxu0 0.0
  %559 = vmatpush2.msra.mxu0 %v419
  %560 = vmatprep.subr.mxu0 0.0
  %561 = vmatpush2.msra.mxu0 %v418
  %562 = vmatprep.subr.mxu0 0.0
  %563 = vmatpush2.msra.mxu0 %v417
  %564 = vmatprep.subr.mxu0 0.0
  %565 = vmatpush2.msra.mxu0 %v416
  %566 = vmatprep.mubr.f32.mxu0 %v367
  %567 = vmatmul.mubr.f32.gmra.mxu0 %v366
  %v568 = vpop.f32.mrf.mxu0
  %v569 = vadd.f32 %v499, %v568
  %v570 = vpop.f32.mrf.mxu0
  %571 = vdwg.mxu0
  %v572 = vmul.f32 %v569, %v569
  %vm573 = vcmask 517120
  %v574 = vsel %vm573, %v572, 0.0
  %575 = vadd.xlane.f32.xlu0 %v574
  %v576 = vpop.xlane.xlu0 %575
  %v577 = vrot.slane %v576, 4
  %v578 = vadd.f32 %v576, %v577
  %v579 = vrot.slane %v578, 2
  %v580 = vadd.f32 %v578, %v579
  %v581 = vrot.slane %v580, 1
  %v582 = vadd.f32 %v580, %v581
  %s583 = vtos %v582
  %v584 = vstv %s583
  %v585 = vrsqrt.pop %v584
  %s586 = vtos %v585
  %s587 = smul.f32 %s583, %s586
  %s588 = sadd.f32 %s583, 1.0
  %v589 = vstv %s588
  %v590 = vrcp.pop %v589
  %s591 = vtos %v590
  %s592 = smul.f32 %s587, %s591
  %v593 = vstv %s592
  %v594 = vmul.f32 %v569, %v593
  %v595 = vld [vmem:[%s5] sm:$0xff]
  %v596 = vld [vmem:[%s5 + $0x8] sm:$0xff]
  %v597 = vld [vmem:[%s5 + $0x10] sm:$0xff]
  %v598 = vld [vmem:[%s5 + $0x18] sm:$0xff]
  %v599 = vld [vmem:[%s5 + $0x20] sm:$0xff]
  %v600 = vld [vmem:[%s5 + $0x28] sm:$0xff]
  %v601 = vld [vmem:[%s5 + $0x30] sm:$0xff]
  %v602 = vld [vmem:[%s5 + $0x38] sm:$0xff]
  %v603 = vld [vmem:[%s5 + $0x40] sm:$0xff]
  %v604 = vld [vmem:[%s5 + $0x48] sm:$0xff]
  %v605 = vld [vmem:[%s5 + $0x50] sm:$0xff]
  %v606 = vld [vmem:[%s5 + $0x58] sm:$0xff]
  %v607 = vld [vmem:[%s5 + $0x60] sm:$0xff]
  %v608 = vld [vmem:[%s5 + $0x68] sm:$0xff]
  %v609 = vld [vmem:[%s5 + $0x70] sm:$0xff]
  %v610 = vld [vmem:[%s5 + $0x78] sm:$0xff]
  %v611 = vld [vmem:[%s5 + $0x80] sm:$0xff]
  %v612 = vld [vmem:[%s5 + $0x88] sm:$0xff]
  %v613 = vld [vmem:[%s5 + $0x90] sm:$0xff]
  %v614 = vld [vmem:[%s5 + $0x98] sm:$0xff]
  %v615 = vld [vmem:[%s5 + $0xa0] sm:$0xff]
  %v616 = vld [vmem:[%s5 + $0xa8] sm:$0xff]
  %v617 = vld [vmem:[%s5 + $0xb0] sm:$0xff]
  %v618 = vld [vmem:[%s5 + $0xb8] sm:$0xff]
  %v619 = vld [vmem:[%s5 + $0xc0] sm:$0xff]
  %v620 = vld [vmem:[%s5 + $0xc8] sm:$0xff]
  %v621 = vld [vmem:[%s5 + $0xd0] sm:$0xff]
  %v622 = vld [vmem:[%s5 + $0xd8] sm:$0xff]
  %v623 = vld [vmem:[%s5 + $0xe0] sm:$0xff]
  %v624 = vld [vmem:[%s5 + $0xe8] sm:$0xff]
  %v625 = vld [vmem:[%s5 + $0xf0] sm:$0xff]
  %v626 = vld [vmem:[%s5 + $0xf8] sm:$0xff]
  %v628 = vsel %vm56, %v594, 0
  %630 = vmatprep.subr.mxu0 0.0
  %631 = vmatpush1.msra.mxu0 0.0
  %632 = vmatprep.subr.mxu0 0.0
  %633 = vmatpush1.msra.mxu0 0.0
  %634 = vmatprep.subr.mxu0 0.0
  %635 = vmatpush1.msra.mxu0 0.0
  %636 = vmatprep.subr.mxu0 0.0
  %637 = vmatpush1.msra.mxu0 0.0
  %638 = vmatprep.subr.mxu0 0.0
  %639 = vmatpush1.msra.mxu0 0.0
  %640 = vmatprep.subr.mxu0 0.0
  %641 = vmatpush1.msra.mxu0 0.0
  %642 = vmatprep.subr.mxu0 0.0
  %643 = vmatpush1.msra.mxu0 0.0
  %644 = vmatprep.subr.mxu0 0.0
  %645 = vmatpush1.msra.mxu0 0.0
  %646 = vmatprep.subr.mxu0 %v624
  %647 = vmatpush1.msra.mxu0 %v623
  %648 = vmatprep.subr.mxu0 %v620
  %649 = vmatpush1.msra.mxu0 %v619
  %650 = vmatprep.subr.mxu0 %v616
  %651 = vmatpush1.msra.mxu0 %v615
  %652 = vmatprep.subr.mxu0 %v612
  %653 = vmatpush1.msra.mxu0 %v611
  %654 = vmatprep.subr.mxu0 %v608
  %655 = vmatpush1.msra.mxu0 %v607
  %656 = vmatprep.subr.mxu0 %v604
  %657 = vmatpush1.msra.mxu0 %v603
  %658 = vmatprep.subr.mxu0 %v600
  %659 = vmatpush1.msra.mxu0 %v599
  %660 = vmatprep.subr.mxu0 %v596
  %661 = vmatpush1.msra.mxu0 %v595
  %662 = vmatprep.subr.mxu0 0.0
  %663 = vmatpush2.msra.mxu0 0.0
  %664 = vmatprep.subr.mxu0 0.0
  %665 = vmatpush2.msra.mxu0 0.0
  %666 = vmatprep.subr.mxu0 0.0
  %667 = vmatpush2.msra.mxu0 0.0
  %668 = vmatprep.subr.mxu0 0.0
  %669 = vmatpush2.msra.mxu0 0.0
  %670 = vmatprep.subr.mxu0 0.0
  %671 = vmatpush2.msra.mxu0 0.0
  %672 = vmatprep.subr.mxu0 0.0
  %673 = vmatpush2.msra.mxu0 0.0
  %674 = vmatprep.subr.mxu0 0.0
  %675 = vmatpush2.msra.mxu0 0.0
  %676 = vmatprep.subr.mxu0 0.0
  %677 = vmatpush2.msra.mxu0 0.0
  %678 = vmatprep.subr.mxu0 0.0
  %679 = vmatpush2.msra.mxu0 0.0
  %680 = vmatprep.subr.mxu0 0.0
  %681 = vmatpush2.msra.mxu0 0.0
  %682 = vmatprep.subr.mxu0 0.0
  %683 = vmatpush2.msra.mxu0 0.0
  %684 = vmatprep.subr.mxu0 0.0
  %685 = vmatpush2.msra.mxu0 0.0
  %686 = vmatprep.subr.mxu0 0.0
  %687 = vmatpush2.msra.mxu0 0.0
  %688 = vmatprep.subr.mxu0 0.0
  %689 = vmatpush2.msra.mxu0 0.0
  %690 = vmatprep.subr.mxu0 0.0
  %691 = vmatpush2.msra.mxu0 0.0
  %692 = vmatprep.subr.mxu0 0.0
  %693 = vmatpush2.msra.mxu0 0.0
  %694 = vmatprep.mubr.f32.mxu0 0.0
  %695 = vmatmul.mubr.f32.gmra.mxu0 %v628
  %v696 = vpop.f32.mrf.mxu0
  %v697 = vadd.f32 0.0, %v696
  %v698 = vpop.f32.mrf.mxu0
  %v699 = vadd.f32 0.0, %v698
  %700 = vdwg.mxu0
  %701 = vmatprep.subr.mxu0 0.0
  %702 = vmatpush1.msra.mxu0 0.0
  %703 = vmatprep.subr.mxu0 0.0
  %704 = vmatpush1.msra.mxu0 0.0
  %705 = vmatprep.subr.mxu0 0.0
  %706 = vmatpush1.msra.mxu0 0.0
  %707 = vmatprep.subr.mxu0 0.0
  %708 = vmatpush1.msra.mxu0 0.0
  %709 = vmatprep.subr.mxu0 0.0
  %710 = vmatpush1.msra.mxu0 0.0
  %711 = vmatprep.subr.mxu0 0.0
  %712 = vmatpush1.msra.mxu0 0.0
  %713 = vmatprep.subr.mxu0 0.0
  %714 = vmatpush1.msra.mxu0 0.0
  %715 = vmatprep.subr.mxu0 0.0
  %716 = vmatpush1.msra.mxu0 0.0
  %717 = vmatprep.subr.mxu0 %v626
  %718 = vmatpush1.msra.mxu0 %v625
  %719 = vmatprep.subr.mxu0 %v622
  %720 = vmatpush1.msra.mxu0 %v621
  %721 = vmatprep.subr.mxu0 %v618
  %722 = vmatpush1.msra.mxu0 %v617
  %723 = vmatprep.subr.mxu0 %v614
  %724 = vmatpush1.msra.mxu0 %v613
  %725 = vmatprep.subr.mxu0 %v610
  %726 = vmatpush1.msra.mxu0 %v609
  %727 = vmatprep.subr.mxu0 %v606
  %728 = vmatpush1.msra.mxu0 %v605
  %729 = vmatprep.subr.mxu0 %v602
  %730 = vmatpush1.msra.mxu0 %v601
  %731 = vmatprep.subr.mxu0 %v598
  %732 = vmatpush1.msra.mxu0 %v597
  %733 = vmatprep.subr.mxu0 0.0
  %734 = vmatpush2.msra.mxu0 0.0
  %735 = vmatprep.subr.mxu0 0.0
  %736 = vmatpush2.msra.mxu0 0.0
  %737 = vmatprep.subr.mxu0 0.0
  %738 = vmatpush2.msra.mxu0 0.0
  %739 = vmatprep.subr.mxu0 0.0
  %740 = vmatpush2.msra.mxu0 0.0
  %741 = vmatprep.subr.mxu0 0.0
  %742 = vmatpush2.msra.mxu0 0.0
  %743 = vmatprep.subr.mxu0 0.0
  %744 = vmatpush2.msra.mxu0 0.0
  %745 = vmatprep.subr.mxu0 0.0
  %746 = vmatpush2.msra.mxu0 0.0
  %747 = vmatprep.subr.mxu0 0.0
  %748 = vmatpush2.msra.mxu0 0.0
  %749 = vmatprep.subr.mxu0 0.0
  %750 = vmatpush2.msra.mxu0 0.0
  %751 = vmatprep.subr.mxu0 0.0
  %752 = vmatpush2.msra.mxu0 0.0
  %753 = vmatprep.subr.mxu0 0.0
  %754 = vmatpush2.msra.mxu0 0.0
  %755 = vmatprep.subr.mxu0 0.0
  %756 = vmatpush2.msra.mxu0 0.0
  %757 = vmatprep.subr.mxu0 0.0
  %758 = vmatpush2.msra.mxu0 0.0
  %759 = vmatprep.subr.mxu0 0.0
  %760 = vmatpush2.msra.mxu0 0.0
  %761 = vmatprep.subr.mxu0 0.0
  %762 = vmatpush2.msra.mxu0 0.0
  %763 = vmatprep.subr.mxu0 0.0
  %764 = vmatpush2.msra.mxu0 0.0
  %765 = vmatprep.mubr.f32.mxu0 0.0
  %766 = vmatmul.mubr.f32.gmra.mxu0 %v628
  %v767 = vpop.f32.mrf.mxu0
  %v768 = vadd.f32 0.0, %v767
  %v769 = vpop.f32.mrf.mxu0
  %v770 = vadd.f32 0.0, %v769
  %771 = vdwg.mxu0
  %v772 = vmul.f32 %v127, %v697
  %v773 = vmul.f32 %v129, %v699
  %v774 = vmul.f32 %v198, %v768
  %v775 = vmul.f32 %v200, %v770
  %v776 = vld [vmem:[%s3] sm:$0xff]
  %v777 = vld [vmem:[%s3 + $0x8] sm:$0xff]
  %v778 = vld [vmem:[%s3 + $0x10] sm:$0xff]
  %v779 = vld [vmem:[%s3 + $0x18] sm:$0xff]
  %v780 = vld [vmem:[%s3 + $0x20] sm:$0xff]
  %v781 = vld [vmem:[%s3 + $0x28] sm:$0xff]
  %v782 = vld [vmem:[%s3 + $0x30] sm:$0xff]
  %v783 = vld [vmem:[%s3 + $0x38] sm:$0xff]
  %v784 = vld [vmem:[%s3 + $0x40] sm:$0xff]
  %v785 = vld [vmem:[%s3 + $0x48] sm:$0xff]
  %v786 = vld [vmem:[%s3 + $0x50] sm:$0xff]
  %v787 = vld [vmem:[%s3 + $0x58] sm:$0xff]
  %v788 = vld [vmem:[%s3 + $0x60] sm:$0xff]
  %v789 = vld [vmem:[%s3 + $0x68] sm:$0xff]
  %v790 = vld [vmem:[%s3 + $0x70] sm:$0xff]
  %v791 = vld [vmem:[%s3 + $0x78] sm:$0xff]
  %v792 = vld [vmem:[%s3 + $0x80] sm:$0xff]
  %v793 = vld [vmem:[%s3 + $0x88] sm:$0xff]
  %v794 = vld [vmem:[%s3 + $0x90] sm:$0xff]
  %v795 = vld [vmem:[%s3 + $0x98] sm:$0xff]
  %v796 = vld [vmem:[%s3 + $0xa0] sm:$0xff]
  %v797 = vld [vmem:[%s3 + $0xa8] sm:$0xff]
  %v798 = vld [vmem:[%s3 + $0xb0] sm:$0xff]
  %v799 = vld [vmem:[%s3 + $0xb8] sm:$0xff]
  %v800 = vld [vmem:[%s3 + $0xc0] sm:$0xff]
  %v801 = vld [vmem:[%s3 + $0xc8] sm:$0xff]
  %v802 = vld [vmem:[%s3 + $0xd0] sm:$0xff]
  %v803 = vld [vmem:[%s3 + $0xd8] sm:$0xff]
  %v804 = vld [vmem:[%s3 + $0xe0] sm:$0xff]
  %v805 = vld [vmem:[%s3 + $0xe8] sm:$0xff]
  %v806 = vld [vmem:[%s3 + $0xf0] sm:$0xff]
  %v807 = vld [vmem:[%s3 + $0xf8] sm:$0xff]
  %v808 = vld [vmem:[%s3 + $0x100] sm:$0xff]
  %v809 = vld [vmem:[%s3 + $0x108] sm:$0xff]
  %v810 = vld [vmem:[%s3 + $0x110] sm:$0xff]
  %v811 = vld [vmem:[%s3 + $0x118] sm:$0xff]
  %v812 = vld [vmem:[%s3 + $0x120] sm:$0xff]
  %v813 = vld [vmem:[%s3 + $0x128] sm:$0xff]
  %v814 = vld [vmem:[%s3 + $0x130] sm:$0xff]
  %v815 = vld [vmem:[%s3 + $0x138] sm:$0xff]
  %v816 = vld [vmem:[%s3 + $0x140] sm:$0xff]
  %v817 = vld [vmem:[%s3 + $0x148] sm:$0xff]
  %v818 = vld [vmem:[%s3 + $0x150] sm:$0xff]
  %v819 = vld [vmem:[%s3 + $0x158] sm:$0xff]
  %v820 = vld [vmem:[%s3 + $0x160] sm:$0xff]
  %v821 = vld [vmem:[%s3 + $0x168] sm:$0xff]
  %v822 = vld [vmem:[%s3 + $0x170] sm:$0xff]
  %v823 = vld [vmem:[%s3 + $0x178] sm:$0xff]
  %v824 = vld [vmem:[%s3 + $0x180] sm:$0xff]
  %v825 = vld [vmem:[%s3 + $0x188] sm:$0xff]
  %v826 = vld [vmem:[%s3 + $0x190] sm:$0xff]
  %v827 = vld [vmem:[%s3 + $0x198] sm:$0xff]
  %v828 = vld [vmem:[%s3 + $0x1a0] sm:$0xff]
  %v829 = vld [vmem:[%s3 + $0x1a8] sm:$0xff]
  %v830 = vld [vmem:[%s3 + $0x1b0] sm:$0xff]
  %v831 = vld [vmem:[%s3 + $0x1b8] sm:$0xff]
  %v832 = vld [vmem:[%s3 + $0x1c0] sm:$0xff]
  %v833 = vld [vmem:[%s3 + $0x1c8] sm:$0xff]
  %v834 = vld [vmem:[%s3 + $0x1d0] sm:$0xff]
  %v835 = vld [vmem:[%s3 + $0x1d8] sm:$0xff]
  %v836 = vld [vmem:[%s3 + $0x1e0] sm:$0xff]
  %v837 = vld [vmem:[%s3 + $0x1e8] sm:$0xff]
  %v838 = vld [vmem:[%s3 + $0x1f0] sm:$0xff]
  %v839 = vld [vmem:[%s3 + $0x1f8] sm:$0xff]
  %840 = vmatprep.subr.mxu0 0.0
  %841 = vmatpush1.msra.mxu0 %v791
  %842 = vmatprep.subr.mxu0 0.0
  %843 = vmatpush1.msra.mxu0 %v790
  %844 = vmatprep.subr.mxu0 0.0
  %845 = vmatpush1.msra.mxu0 %v789
  %846 = vmatprep.subr.mxu0 0.0
  %847 = vmatpush1.msra.mxu0 %v788
  %848 = vmatprep.subr.mxu0 0.0
  %849 = vmatpush1.msra.mxu0 %v787
  %850 = vmatprep.subr.mxu0 0.0
  %851 = vmatpush1.msra.mxu0 %v786
  %852 = vmatprep.subr.mxu0 0.0
  %853 = vmatpush1.msra.mxu0 %v785
  %854 = vmatprep.subr.mxu0 0.0
  %855 = vmatpush1.msra.mxu0 %v784
  %856 = vmatprep.subr.mxu0 0.0
  %857 = vmatpush1.msra.mxu0 %v783
  %858 = vmatprep.subr.mxu0 0.0
  %859 = vmatpush1.msra.mxu0 %v782
  %860 = vmatprep.subr.mxu0 0.0
  %861 = vmatpush1.msra.mxu0 %v781
  %862 = vmatprep.subr.mxu0 0.0
  %863 = vmatpush1.msra.mxu0 %v780
  %864 = vmatprep.subr.mxu0 0.0
  %865 = vmatpush1.msra.mxu0 %v779
  %866 = vmatprep.subr.mxu0 0.0
  %867 = vmatpush1.msra.mxu0 %v778
  %868 = vmatprep.subr.mxu0 0.0
  %869 = vmatpush1.msra.mxu0 %v777
  %870 = vmatprep.subr.mxu0 0.0
  %871 = vmatpush1.msra.mxu0 %v776
  %872 = vmatprep.subr.mxu0 0.0
  %873 = vmatpush2.msra.mxu0 %v807
  %874 = vmatprep.subr.mxu0 0.0
  %875 = vmatpush2.msra.mxu0 %v806
  %876 = vmatprep.subr.mxu0 0.0
  %877 = vmatpush2.msra.mxu0 %v805
  %878 = vmatprep.subr.mxu0 0.0
  %879 = vmatpush2.msra.mxu0 %v804
  %880 = vmatprep.subr.mxu0 0.0
  %881 = vmatpush2.msra.mxu0 %v803
  %882 = vmatprep.subr.mxu0 0.0
  %883 = vmatpush2.msra.mxu0 %v802
  %884 = vmatprep.subr.mxu0 0.0
  %885 = vmatpush2.msra.mxu0 %v801
  %886 = vmatprep.subr.mxu0 0.0
  %887 = vmatpush2.msra.mxu0 %v800
  %888 = vmatprep.subr.mxu0 0.0
  %889 = vmatpush2.msra.mxu0 %v799
  %890 = vmatprep.subr.mxu0 0.0
  %891 = vmatpush2.msra.mxu0 %v798
  %892 = vmatprep.subr.mxu0 0.0
  %893 = vmatpush2.msra.mxu0 %v797
  %894 = vmatprep.subr.mxu0 0.0
  %895 = vmatpush2.msra.mxu0 %v796
  %896 = vmatprep.subr.mxu0 0.0
  %897 = vmatpush2.msra.mxu0 %v795
  %898 = vmatprep.subr.mxu0 0.0
  %899 = vmatpush2.msra.mxu0 %v794
  %900 = vmatprep.subr.mxu0 0.0
  %901 = vmatpush2.msra.mxu0 %v793
  %902 = vmatprep.subr.mxu0 0.0
  %903 = vmatpush2.msra.mxu0 %v792
  %904 = vmatprep.mubr.f32.mxu0 %v773
  %905 = vmatmul.mubr.f32.gmra.mxu0 %v772
  %v906 = vpop.f32.mrf.mxu0
  %v907 = vadd.f32 0.0, %v906
  %v908 = vpop.f32.mrf.mxu0
  %909 = vdwg.mxu0
  %910 = vmatprep.subr.mxu0 0.0
  %911 = vmatpush1.msra.mxu0 %v823
  %912 = vmatprep.subr.mxu0 0.0
  %913 = vmatpush1.msra.mxu0 %v822
  %914 = vmatprep.subr.mxu0 0.0
  %915 = vmatpush1.msra.mxu0 %v821
  %916 = vmatprep.subr.mxu0 0.0
  %917 = vmatpush1.msra.mxu0 %v820
  %918 = vmatprep.subr.mxu0 0.0
  %919 = vmatpush1.msra.mxu0 %v819
  %920 = vmatprep.subr.mxu0 0.0
  %921 = vmatpush1.msra.mxu0 %v818
  %922 = vmatprep.subr.mxu0 0.0
  %923 = vmatpush1.msra.mxu0 %v817
  %924 = vmatprep.subr.mxu0 0.0
  %925 = vmatpush1.msra.mxu0 %v816
  %926 = vmatprep.subr.mxu0 0.0
  %927 = vmatpush1.msra.mxu0 %v815
  %928 = vmatprep.subr.mxu0 0.0
  %929 = vmatpush1.msra.mxu0 %v814
  %930 = vmatprep.subr.mxu0 0.0
  %931 = vmatpush1.msra.mxu0 %v813
  %932 = vmatprep.subr.mxu0 0.0
  %933 = vmatpush1.msra.mxu0 %v812
  %934 = vmatprep.subr.mxu0 0.0
  %935 = vmatpush1.msra.mxu0 %v811
  %936 = vmatprep.subr.mxu0 0.0
  %937 = vmatpush1.msra.mxu0 %v810
  %938 = vmatprep.subr.mxu0 0.0
  %939 = vmatpush1.msra.mxu0 %v809
  %940 = vmatprep.subr.mxu0 0.0
  %941 = vmatpush1.msra.mxu0 %v808
  %942 = vmatprep.subr.mxu0 0.0
  %943 = vmatpush2.msra.mxu0 %v839
  %944 = vmatprep.subr.mxu0 0.0
  %945 = vmatpush2.msra.mxu0 %v838
  %946 = vmatprep.subr.mxu0 0.0
  %947 = vmatpush2.msra.mxu0 %v837
  %948 = vmatprep.subr.mxu0 0.0
  %949 = vmatpush2.msra.mxu0 %v836
  %950 = vmatprep.subr.mxu0 0.0
  %951 = vmatpush2.msra.mxu0 %v835
  %952 = vmatprep.subr.mxu0 0.0
  %953 = vmatpush2.msra.mxu0 %v834
  %954 = vmatprep.subr.mxu0 0.0
  %955 = vmatpush2.msra.mxu0 %v833
  %956 = vmatprep.subr.mxu0 0.0
  %957 = vmatpush2.msra.mxu0 %v832
  %958 = vmatprep.subr.mxu0 0.0
  %959 = vmatpush2.msra.mxu0 %v831
  %960 = vmatprep.subr.mxu0 0.0
  %961 = vmatpush2.msra.mxu0 %v830
  %962 = vmatprep.subr.mxu0 0.0
  %963 = vmatpush2.msra.mxu0 %v829
  %964 = vmatprep.subr.mxu0 0.0
  %965 = vmatpush2.msra.mxu0 %v828
  %966 = vmatprep.subr.mxu0 0.0
  %967 = vmatpush2.msra.mxu0 %v827
  %968 = vmatprep.subr.mxu0 0.0
  %969 = vmatpush2.msra.mxu0 %v826
  %970 = vmatprep.subr.mxu0 0.0
  %971 = vmatpush2.msra.mxu0 %v825
  %972 = vmatprep.subr.mxu0 0.0
  %973 = vmatpush2.msra.mxu0 %v824
  %974 = vmatprep.mubr.f32.mxu0 %v775
  %975 = vmatmul.mubr.f32.gmra.mxu0 %v774
  %v976 = vpop.f32.mrf.mxu0
  %v977 = vadd.f32 %v907, %v976
  %v978 = vpop.f32.mrf.mxu0
  %979 = vdwg.mxu0
  %vm980 = vcmask 254976
  %v981 = vsel %vm980, %v977, -inf
  %v982 = vrot.slane %v981, 4
  %v983 = vmax.f32 %v981, %v982
  %v984 = vrot.slane %v983, 2
  %v985 = vmax.f32 %v983, %v984
  %v986 = vrot.slane %v985, 1
  %v987 = vmax.f32 %v985, %v986
  %v988 = vsub.f32 %v977, %v987
  %v989 = vmul.f32 %v988, 1.442695
  %v990 = vpow.pop %v989
  %v991 = vsel %vm980, %v990, 0.0
  %v992 = vrot.slane %v991, 4
  %v993 = vadd.f32 %v991, %v992
  %v994 = vrot.slane %v993, 2
  %v995 = vadd.f32 %v993, %v994
  %v996 = vrot.slane %v995, 1
  %v997 = vadd.f32 %v995, %v996
  %v998 = vrcp.pop %v997
  %v999 = vmul.f32 %v990, %v998
  %v1001 = vsel %vm218, %v999, 0
  %1003 = vmatprep.subr.mxu0 0.0
  %1004 = vmatpush1.msra.mxu0 0.0
  %1005 = vmatprep.subr.mxu0 0.0
  %1006 = vmatpush1.msra.mxu0 0.0
  %1007 = vmatprep.subr.mxu0 0.0
  %1008 = vmatpush1.msra.mxu0 0.0
  %1009 = vmatprep.subr.mxu0 0.0
  %1010 = vmatpush1.msra.mxu0 0.0
  %1011 = vmatprep.subr.mxu0 0.0
  %1012 = vmatpush1.msra.mxu0 0.0
  %1013 = vmatprep.subr.mxu0 0.0
  %1014 = vmatpush1.msra.mxu0 0.0
  %1015 = vmatprep.subr.mxu0 0.0
  %1016 = vmatpush1.msra.mxu0 0.0
  %1017 = vmatprep.subr.mxu0 0.0
  %1018 = vmatpush1.msra.mxu0 0.0
  %1019 = vmatprep.subr.mxu0 0.0
  %1020 = vmatpush1.msra.mxu0 0.0
  %1021 = vmatprep.subr.mxu0 0.0
  %1022 = vmatpush1.msra.mxu0 0.0
  %1023 = vmatprep.subr.mxu0 0.0
  %1024 = vmatpush1.msra.mxu0 0.0
  %1025 = vmatprep.subr.mxu0 0.0
  %1026 = vmatpush1.msra.mxu0 0.0
  %1027 = vmatprep.subr.mxu0 %v215
  %1028 = vmatpush1.msra.mxu0 %v214
  %1029 = vmatprep.subr.mxu0 %v211
  %1030 = vmatpush1.msra.mxu0 %v210
  %1031 = vmatprep.subr.mxu0 %v207
  %1032 = vmatpush1.msra.mxu0 %v206
  %1033 = vmatprep.subr.mxu0 %v203
  %1034 = vmatpush1.msra.mxu0 %v202
  %1035 = vmatprep.subr.mxu0 0.0
  %1036 = vmatpush2.msra.mxu0 0.0
  %1037 = vmatprep.subr.mxu0 0.0
  %1038 = vmatpush2.msra.mxu0 0.0
  %1039 = vmatprep.subr.mxu0 0.0
  %1040 = vmatpush2.msra.mxu0 0.0
  %1041 = vmatprep.subr.mxu0 0.0
  %1042 = vmatpush2.msra.mxu0 0.0
  %1043 = vmatprep.subr.mxu0 0.0
  %1044 = vmatpush2.msra.mxu0 0.0
  %1045 = vmatprep.subr.mxu0 0.0
  %1046 = vmatpush2.msra.mxu0 0.0
  %1047 = vmatprep.subr.mxu0 0.0
  %1048 = vmatpush2.msra.mxu0 0.0
  %1049 = vmatprep.subr.mxu0 0.0
  %1050 = vmatpush2.msra.mxu0 0.0
  %1051 = vmatprep.subr.mxu0 0.0
  %1052 = vmatpush2.msra.mxu0 0.0
  %1053 = vmatprep.subr.mxu0 0.0
  %1054 = vmatpush2.msra.mxu0 0.0
  %1055 = vmatprep.subr.mxu0 0.0
  %1056 = vmatpush2.msra.mxu0 0.0
  %1057 = vmatprep.subr.mxu0 0.0
  %1058 = vmatpush2.msra.mxu0 0.0
  %1059 = vmatprep.subr.mxu0 0.0
  %1060 = vmatpush2.msra.mxu0 0.0
  %1061 = vmatprep.subr.mxu0 0.0
  %1062 = vmatpush2.msra.mxu0 0.0
  %1063 = vmatprep.subr.mxu0 0.0
  %1064 = vmatpush2.msra.mxu0 0.0
  %1065 = vmatprep.subr.mxu0 0.0
  %1066 = vmatpush2.msra.mxu0 0.0
  %1067 = vmatprep.mubr.f32.mxu0 0.0
  %1068 = vmatmul.mubr.f32.gmra.mxu0 %v1001
  %v1069 = vpop.f32.mrf.mxu0
  %v1070 = vadd.f32 0.0, %v1069
  %v1071 = vpop.f32.mrf.mxu0
  %v1072 = vadd.f32 0.0, %v1071
  %1073 = vdwg.mxu0
  %1074 = vmatprep.subr.mxu0 0.0
  %1075 = vmatpush1.msra.mxu0 0.0
  %1076 = vmatprep.subr.mxu0 0.0
  %1077 = vmatpush1.msra.mxu0 0.0
  %1078 = vmatprep.subr.mxu0 0.0
  %1079 = vmatpush1.msra.mxu0 0.0
  %1080 = vmatprep.subr.mxu0 0.0
  %1081 = vmatpush1.msra.mxu0 0.0
  %1082 = vmatprep.subr.mxu0 0.0
  %1083 = vmatpush1.msra.mxu0 0.0
  %1084 = vmatprep.subr.mxu0 0.0
  %1085 = vmatpush1.msra.mxu0 0.0
  %1086 = vmatprep.subr.mxu0 0.0
  %1087 = vmatpush1.msra.mxu0 0.0
  %1088 = vmatprep.subr.mxu0 0.0
  %1089 = vmatpush1.msra.mxu0 0.0
  %1090 = vmatprep.subr.mxu0 0.0
  %1091 = vmatpush1.msra.mxu0 0.0
  %1092 = vmatprep.subr.mxu0 0.0
  %1093 = vmatpush1.msra.mxu0 0.0
  %1094 = vmatprep.subr.mxu0 0.0
  %1095 = vmatpush1.msra.mxu0 0.0
  %1096 = vmatprep.subr.mxu0 0.0
  %1097 = vmatpush1.msra.mxu0 0.0
  %1098 = vmatprep.subr.mxu0 %v217
  %1099 = vmatpush1.msra.mxu0 %v216
  %1100 = vmatprep.subr.mxu0 %v213
  %1101 = vmatpush1.msra.mxu0 %v212
  %1102 = vmatprep.subr.mxu0 %v209
  %1103 = vmatpush1.msra.mxu0 %v208
  %1104 = vmatprep.subr.mxu0 %v205
  %1105 = vmatpush1.msra.mxu0 %v204
  %1106 = vmatprep.subr.mxu0 0.0
  %1107 = vmatpush2.msra.mxu0 0.0
  %1108 = vmatprep.subr.mxu0 0.0
  %1109 = vmatpush2.msra.mxu0 0.0
  %1110 = vmatprep.subr.mxu0 0.0
  %1111 = vmatpush2.msra.mxu0 0.0
  %1112 = vmatprep.subr.mxu0 0.0
  %1113 = vmatpush2.msra.mxu0 0.0
  %1114 = vmatprep.subr.mxu0 0.0
  %1115 = vmatpush2.msra.mxu0 0.0
  %1116 = vmatprep.subr.mxu0 0.0
  %1117 = vmatpush2.msra.mxu0 0.0
  %1118 = vmatprep.subr.mxu0 0.0
  %1119 = vmatpush2.msra.mxu0 0.0
  %1120 = vmatprep.subr.mxu0 0.0
  %1121 = vmatpush2.msra.mxu0 0.0
  %1122 = vmatprep.subr.mxu0 0.0
  %1123 = vmatpush2.msra.mxu0 0.0
  %1124 = vmatprep.subr.mxu0 0.0
  %1125 = vmatpush2.msra.mxu0 0.0
  %1126 = vmatprep.subr.mxu0 0.0
  %1127 = vmatpush2.msra.mxu0 0.0
  %1128 = vmatprep.subr.mxu0 0.0
  %1129 = vmatpush2.msra.mxu0 0.0
  %1130 = vmatprep.subr.mxu0 0.0
  %1131 = vmatpush2.msra.mxu0 0.0
  %1132 = vmatprep.subr.mxu0 0.0
  %1133 = vmatpush2.msra.mxu0 0.0
  %1134 = vmatprep.subr.mxu0 0.0
  %1135 = vmatpush2.msra.mxu0 0.0
  %1136 = vmatprep.subr.mxu0 0.0
  %1137 = vmatpush2.msra.mxu0 0.0
  %1138 = vmatprep.mubr.f32.mxu0 0.0
  %1139 = vmatmul.mubr.f32.gmra.mxu0 %v1001
  %v1140 = vpop.f32.mrf.mxu0
  %v1141 = vadd.f32 0.0, %v1140
  %v1142 = vpop.f32.mrf.mxu0
  %v1143 = vadd.f32 0.0, %v1142
  %1144 = vdwg.mxu0
  %v1145 = vmul.f32 %v1070, %v127
  %v1146 = vmul.f32 %v1072, %v129
  %v1147 = vmul.f32 %v1141, %v198
  %v1148 = vmul.f32 %v1143, %v200
  %1149 = vmatprep.subr.mxu0 0.0
  %1150 = vmatpush1.msra.mxu0 %v383
  %1151 = vmatprep.subr.mxu0 0.0
  %1152 = vmatpush1.msra.mxu0 %v382
  %1153 = vmatprep.subr.mxu0 0.0
  %1154 = vmatpush1.msra.mxu0 %v381
  %1155 = vmatprep.subr.mxu0 0.0
  %1156 = vmatpush1.msra.mxu0 %v380
  %1157 = vmatprep.subr.mxu0 0.0
  %1158 = vmatpush1.msra.mxu0 %v379
  %1159 = vmatprep.subr.mxu0 0.0
  %1160 = vmatpush1.msra.mxu0 %v378
  %1161 = vmatprep.subr.mxu0 0.0
  %1162 = vmatpush1.msra.mxu0 %v377
  %1163 = vmatprep.subr.mxu0 0.0
  %1164 = vmatpush1.msra.mxu0 %v376
  %1165 = vmatprep.subr.mxu0 0.0
  %1166 = vmatpush1.msra.mxu0 %v375
  %1167 = vmatprep.subr.mxu0 0.0
  %1168 = vmatpush1.msra.mxu0 %v374
  %1169 = vmatprep.subr.mxu0 0.0
  %1170 = vmatpush1.msra.mxu0 %v373
  %1171 = vmatprep.subr.mxu0 0.0
  %1172 = vmatpush1.msra.mxu0 %v372
  %1173 = vmatprep.subr.mxu0 0.0
  %1174 = vmatpush1.msra.mxu0 %v371
  %1175 = vmatprep.subr.mxu0 0.0
  %1176 = vmatpush1.msra.mxu0 %v370
  %1177 = vmatprep.subr.mxu0 0.0
  %1178 = vmatpush1.msra.mxu0 %v369
  %1179 = vmatprep.subr.mxu0 0.0
  %1180 = vmatpush1.msra.mxu0 %v368
  %1181 = vmatprep.subr.mxu0 0.0
  %1182 = vmatpush2.msra.mxu0 %v399
  %1183 = vmatprep.subr.mxu0 0.0
  %1184 = vmatpush2.msra.mxu0 %v398
  %1185 = vmatprep.subr.mxu0 0.0
  %1186 = vmatpush2.msra.mxu0 %v397
  %1187 = vmatprep.subr.mxu0 0.0
  %1188 = vmatpush2.msra.mxu0 %v396
  %1189 = vmatprep.subr.mxu0 0.0
  %1190 = vmatpush2.msra.mxu0 %v395
  %1191 = vmatprep.subr.mxu0 0.0
  %1192 = vmatpush2.msra.mxu0 %v394
  %1193 = vmatprep.subr.mxu0 0.0
  %1194 = vmatpush2.msra.mxu0 %v393
  %1195 = vmatprep.subr.mxu0 0.0
  %1196 = vmatpush2.msra.mxu0 %v392
  %1197 = vmatprep.subr.mxu0 0.0
  %1198 = vmatpush2.msra.mxu0 %v391
  %1199 = vmatprep.subr.mxu0 0.0
  %1200 = vmatpush2.msra.mxu0 %v390
  %1201 = vmatprep.subr.mxu0 0.0
  %1202 = vmatpush2.msra.mxu0 %v389
  %1203 = vmatprep.subr.mxu0 0.0
  %1204 = vmatpush2.msra.mxu0 %v388
  %1205 = vmatprep.subr.mxu0 0.0
  %1206 = vmatpush2.msra.mxu0 %v387
  %1207 = vmatprep.subr.mxu0 0.0
  %1208 = vmatpush2.msra.mxu0 %v386
  %1209 = vmatprep.subr.mxu0 0.0
  %1210 = vmatpush2.msra.mxu0 %v385
  %1211 = vmatprep.subr.mxu0 0.0
  %1212 = vmatpush2.msra.mxu0 %v384
  %1213 = vmatprep.mubr.f32.mxu0 %v1146
  %1214 = vmatmul.mubr.f32.gmra.mxu0 %v1145
  %v1215 = vpop.f32.mrf.mxu0
  %v1216 = vadd.f32 0.0, %v1215
  %v1217 = vpop.f32.mrf.mxu0
  %1218 = vdwg.mxu0
  %1219 = vmatprep.subr.mxu0 0.0
  %1220 = vmatpush1.msra.mxu0 %v415
  %1221 = vmatprep.subr.mxu0 0.0
  %1222 = vmatpush1.msra.mxu0 %v414
  %1223 = vmatprep.subr.mxu0 0.0
  %1224 = vmatpush1.msra.mxu0 %v413
  %1225 = vmatprep.subr.mxu0 0.0
  %1226 = vmatpush1.msra.mxu0 %v412
  %1227 = vmatprep.subr.mxu0 0.0
  %1228 = vmatpush1.msra.mxu0 %v411
  %1229 = vmatprep.subr.mxu0 0.0
  %1230 = vmatpush1.msra.mxu0 %v410
  %1231 = vmatprep.subr.mxu0 0.0
  %1232 = vmatpush1.msra.mxu0 %v409
  %1233 = vmatprep.subr.mxu0 0.0
  %1234 = vmatpush1.msra.mxu0 %v408
  %1235 = vmatprep.subr.mxu0 0.0
  %1236 = vmatpush1.msra.mxu0 %v407
  %1237 = vmatprep.subr.mxu0 0.0
  %1238 = vmatpush1.msra.mxu0 %v406
  %1239 = vmatprep.subr.mxu0 0.0
  %1240 = vmatpush1.msra.mxu0 %v405
  %1241 = vmatprep.subr.mxu0 0.0
  %1242 = vmatpush1.msra.mxu0 %v404
  %1243 = vmatprep.subr.mxu0 0.0
  %1244 = vmatpush1.msra.mxu0 %v403
  %1245 = vmatprep.subr.mxu0 0.0
  %1246 = vmatpush1.msra.mxu0 %v402
  %1247 = vmatprep.subr.mxu0 0.0
  %1248 = vmatpush1.msra.mxu0 %v401
  %1249 = vmatprep.subr.mxu0 0.0
  %1250 = vmatpush1.msra.mxu0 %v400
  %1251 = vmatprep.subr.mxu0 0.0
  %1252 = vmatpush2.msra.mxu0 %v431
  %1253 = vmatprep.subr.mxu0 0.0
  %1254 = vmatpush2.msra.mxu0 %v430
  %1255 = vmatprep.subr.mxu0 0.0
  %1256 = vmatpush2.msra.mxu0 %v429
  %1257 = vmatprep.subr.mxu0 0.0
  %1258 = vmatpush2.msra.mxu0 %v428
  %1259 = vmatprep.subr.mxu0 0.0
  %1260 = vmatpush2.msra.mxu0 %v427
  %1261 = vmatprep.subr.mxu0 0.0
  %1262 = vmatpush2.msra.mxu0 %v426
  %1263 = vmatprep.subr.mxu0 0.0
  %1264 = vmatpush2.msra.mxu0 %v425
  %1265 = vmatprep.subr.mxu0 0.0
  %1266 = vmatpush2.msra.mxu0 %v424
  %1267 = vmatprep.subr.mxu0 0.0
  %1268 = vmatpush2.msra.mxu0 %v423
  %1269 = vmatprep.subr.mxu0 0.0
  %1270 = vmatpush2.msra.mxu0 %v422
  %1271 = vmatprep.subr.mxu0 0.0
  %1272 = vmatpush2.msra.mxu0 %v421
  %1273 = vmatprep.subr.mxu0 0.0
  %1274 = vmatpush2.msra.mxu0 %v420
  %1275 = vmatprep.subr.mxu0 0.0
  %1276 = vmatpush2.msra.mxu0 %v419
  %1277 = vmatprep.subr.mxu0 0.0
  %1278 = vmatpush2.msra.mxu0 %v418
  %1279 = vmatprep.subr.mxu0 0.0
  %1280 = vmatpush2.msra.mxu0 %v417
  %1281 = vmatprep.subr.mxu0 0.0
  %1282 = vmatpush2.msra.mxu0 %v416
  %1283 = vmatprep.mubr.f32.mxu0 %v1148
  %1284 = vmatmul.mubr.f32.gmra.mxu0 %v1147
  %v1285 = vpop.f32.mrf.mxu0
  %v1286 = vadd.f32 %v1216, %v1285
  %v1287 = vpop.f32.mrf.mxu0
  %1288 = vdwg.mxu0
  %v1289 = vmul.f32 %v1286, %v1286
  %v1290 = vsel %vm573, %v1289, 0.0
  %1291 = vadd.xlane.f32.xlu0 %v1290
  %v1292 = vpop.xlane.xlu0 %1291
  %v1293 = vrot.slane %v1292, 4
  %v1294 = vadd.f32 %v1292, %v1293
  %v1295 = vrot.slane %v1294, 2
  %v1296 = vadd.f32 %v1294, %v1295
  %v1297 = vrot.slane %v1296, 1
  %v1298 = vadd.f32 %v1296, %v1297
  %s1299 = vtos %v1298
  %v1300 = vstv %s1299
  %v1301 = vrsqrt.pop %v1300
  %s1302 = vtos %v1301
  %s1303 = smul.f32 %s1299, %s1302
  %s1304 = sadd.f32 %s1299, 1.0
  %v1305 = vstv %s1304
  %v1306 = vrcp.pop %v1305
  %s1307 = vtos %v1306
  %s1308 = smul.f32 %s1303, %s1307
  %v1309 = vstv %s1308
  %v1310 = vmul.f32 %v1286, %v1309
  %v1312 = vsel %vm56, %v1310, 0
  %1314 = vmatprep.subr.mxu0 0.0
  %1315 = vmatpush1.msra.mxu0 0.0
  %1316 = vmatprep.subr.mxu0 0.0
  %1317 = vmatpush1.msra.mxu0 0.0
  %1318 = vmatprep.subr.mxu0 0.0
  %1319 = vmatpush1.msra.mxu0 0.0
  %1320 = vmatprep.subr.mxu0 0.0
  %1321 = vmatpush1.msra.mxu0 0.0
  %1322 = vmatprep.subr.mxu0 0.0
  %1323 = vmatpush1.msra.mxu0 0.0
  %1324 = vmatprep.subr.mxu0 0.0
  %1325 = vmatpush1.msra.mxu0 0.0
  %1326 = vmatprep.subr.mxu0 0.0
  %1327 = vmatpush1.msra.mxu0 0.0
  %1328 = vmatprep.subr.mxu0 0.0
  %1329 = vmatpush1.msra.mxu0 0.0
  %1330 = vmatprep.subr.mxu0 %v624
  %1331 = vmatpush1.msra.mxu0 %v623
  %1332 = vmatprep.subr.mxu0 %v620
  %1333 = vmatpush1.msra.mxu0 %v619
  %1334 = vmatprep.subr.mxu0 %v616
  %1335 = vmatpush1.msra.mxu0 %v615
  %1336 = vmatprep.subr.mxu0 %v612
  %1337 = vmatpush1.msra.mxu0 %v611
  %1338 = vmatprep.subr.mxu0 %v608
  %1339 = vmatpush1.msra.mxu0 %v607
  %1340 = vmatprep.subr.mxu0 %v604
  %1341 = vmatpush1.msra.mxu0 %v603
  %1342 = vmatprep.subr.mxu0 %v600
  %1343 = vmatpush1.msra.mxu0 %v599
  %1344 = vmatprep.subr.mxu0 %v596
  %1345 = vmatpush1.msra.mxu0 %v595
  %1346 = vmatprep.subr.mxu0 0.0
  %1347 = vmatpush2.msra.mxu0 0.0
  %1348 = vmatprep.subr.mxu0 0.0
  %1349 = vmatpush2.msra.mxu0 0.0
  %1350 = vmatprep.subr.mxu0 0.0
  %1351 = vmatpush2.msra.mxu0 0.0
  %1352 = vmatprep.subr.mxu0 0.0
  %1353 = vmatpush2.msra.mxu0 0.0
  %1354 = vmatprep.subr.mxu0 0.0
  %1355 = vmatpush2.msra.mxu0 0.0
  %1356 = vmatprep.subr.mxu0 0.0
  %1357 = vmatpush2.msra.mxu0 0.0
  %1358 = vmatprep.subr.mxu0 0.0
  %1359 = vmatpush2.msra.mxu0 0.0
  %1360 = vmatprep.subr.mxu0 0.0
  %1361 = vmatpush2.msra.mxu0 0.0
  %1362 = vmatprep.subr.mxu0 0.0
  %1363 = vmatpush2.msra.mxu0 0.0
  %1364 = vmatprep.subr.mxu0 0.0
  %1365 = vmatpush2.msra.mxu0 0.0
  %1366 = vmatprep.subr.mxu0 0.0
  %1367 = vmatpush2.msra.mxu0 0.0
  %1368 = vmatprep.subr.mxu0 0.0
  %1369 = vmatpush2.msra.mxu0 0.0
  %1370 = vmatprep.subr.mxu0 0.0
  %1371 = vmatpush2.msra.mxu0 0.0
  %1372 = vmatprep.subr.mxu0 0.0
  %1373 = vmatpush2.msra.mxu0 0.0
  %1374 = vmatprep.subr.mxu0 0.0
  %1375 = vmatpush2.msra.mxu0 0.0
  %1376 = vmatprep.subr.mxu0 0.0
  %1377 = vmatpush2.msra.mxu0 0.0
  %1378 = vmatprep.mubr.f32.mxu0 0.0
  %1379 = vmatmul.mubr.f32.gmra.mxu0 %v1312
  %v1380 = vpop.f32.mrf.mxu0
  %v1381 = vadd.f32 0.0, %v1380
  %v1382 = vpop.f32.mrf.mxu0
  %v1383 = vadd.f32 0.0, %v1382
  %1384 = vdwg.mxu0
  %1385 = vmatprep.subr.mxu0 0.0
  %1386 = vmatpush1.msra.mxu0 0.0
  %1387 = vmatprep.subr.mxu0 0.0
  %1388 = vmatpush1.msra.mxu0 0.0
  %1389 = vmatprep.subr.mxu0 0.0
  %1390 = vmatpush1.msra.mxu0 0.0
  %1391 = vmatprep.subr.mxu0 0.0
  %1392 = vmatpush1.msra.mxu0 0.0
  %1393 = vmatprep.subr.mxu0 0.0
  %1394 = vmatpush1.msra.mxu0 0.0
  %1395 = vmatprep.subr.mxu0 0.0
  %1396 = vmatpush1.msra.mxu0 0.0
  %1397 = vmatprep.subr.mxu0 0.0
  %1398 = vmatpush1.msra.mxu0 0.0
  %1399 = vmatprep.subr.mxu0 0.0
  %1400 = vmatpush1.msra.mxu0 0.0
  %1401 = vmatprep.subr.mxu0 %v626
  %1402 = vmatpush1.msra.mxu0 %v625
  %1403 = vmatprep.subr.mxu0 %v622
  %1404 = vmatpush1.msra.mxu0 %v621
  %1405 = vmatprep.subr.mxu0 %v618
  %1406 = vmatpush1.msra.mxu0 %v617
  %1407 = vmatprep.subr.mxu0 %v614
  %1408 = vmatpush1.msra.mxu0 %v613
  %1409 = vmatprep.subr.mxu0 %v610
  %1410 = vmatpush1.msra.mxu0 %v609
  %1411 = vmatprep.subr.mxu0 %v606
  %1412 = vmatpush1.msra.mxu0 %v605
  %1413 = vmatprep.subr.mxu0 %v602
  %1414 = vmatpush1.msra.mxu0 %v601
  %1415 = vmatprep.subr.mxu0 %v598
  %1416 = vmatpush1.msra.mxu0 %v597
  %1417 = vmatprep.subr.mxu0 0.0
  %1418 = vmatpush2.msra.mxu0 0.0
  %1419 = vmatprep.subr.mxu0 0.0
  %1420 = vmatpush2.msra.mxu0 0.0
  %1421 = vmatprep.subr.mxu0 0.0
  %1422 = vmatpush2.msra.mxu0 0.0
  %1423 = vmatprep.subr.mxu0 0.0
  %1424 = vmatpush2.msra.mxu0 0.0
  %1425 = vmatprep.subr.mxu0 0.0
  %1426 = vmatpush2.msra.mxu0 0.0
  %1427 = vmatprep.subr.mxu0 0.0
  %1428 = vmatpush2.msra.mxu0 0.0
  %1429 = vmatprep.subr.mxu0 0.0
  %1430 = vmatpush2.msra.mxu0 0.0
  %1431 = vmatprep.subr.mxu0 0.0
  %1432 = vmatpush2.msra.mxu0 0.0
  %1433 = vmatprep.subr.mxu0 0.0
  %1434 = vmatpush2.msra.mxu0 0.0
  %1435 = vmatprep.subr.mxu0 0.0
  %1436 = vmatpush2.msra.mxu0 0.0
  %1437 = vmatprep.subr.mxu0 0.0
  %1438 = vmatpush2.msra.mxu0 0.0
  %1439 = vmatprep.subr.mxu0 0.0
  %1440 = vmatpush2.msra.mxu0 0.0
  %1441 = vmatprep.subr.mxu0 0.0
  %1442 = vmatpush2.msra.mxu0 0.0
  %1443 = vmatprep.subr.mxu0 0.0
  %1444 = vmatpush2.msra.mxu0 0.0
  %1445 = vmatprep.subr.mxu0 0.0
  %1446 = vmatpush2.msra.mxu0 0.0
  %1447 = vmatprep.subr.mxu0 0.0
  %1448 = vmatpush2.msra.mxu0 0.0
  %1449 = vmatprep.mubr.f32.mxu0 0.0
  %1450 = vmatmul.mubr.f32.gmra.mxu0 %v1312
  %v1451 = vpop.f32.mrf.mxu0
  %v1452 = vadd.f32 0.0, %v1451
  %v1453 = vpop.f32.mrf.mxu0
  %v1454 = vadd.f32 0.0, %v1453
  %1455 = vdwg.mxu0
  %v1456 = vmul.f32 %v127, %v1381
  %v1457 = vmul.f32 %v129, %v1383
  %v1458 = vmul.f32 %v198, %v1452
  %v1459 = vmul.f32 %v200, %v1454
  %1460 = vmatprep.subr.mxu0 0.0
  %1461 = vmatpush1.msra.mxu0 %v791
  %1462 = vmatprep.subr.mxu0 0.0
  %1463 = vmatpush1.msra.mxu0 %v790
  %1464 = vmatprep.subr.mxu0 0.0
  %1465 = vmatpush1.msra.mxu0 %v789
  %1466 = vmatprep.subr.mxu0 0.0
  %1467 = vmatpush1.msra.mxu0 %v788
  %1468 = vmatprep.subr.mxu0 0.0
  %1469 = vmatpush1.msra.mxu0 %v787
  %1470 = vmatprep.subr.mxu0 0.0
  %1471 = vmatpush1.msra.mxu0 %v786
  %1472 = vmatprep.subr.mxu0 0.0
  %1473 = vmatpush1.msra.mxu0 %v785
  %1474 = vmatprep.subr.mxu0 0.0
  %1475 = vmatpush1.msra.mxu0 %v784
  %1476 = vmatprep.subr.mxu0 0.0
  %1477 = vmatpush1.msra.mxu0 %v783
  %1478 = vmatprep.subr.mxu0 0.0
  %1479 = vmatpush1.msra.mxu0 %v782
  %1480 = vmatprep.subr.mxu0 0.0
  %1481 = vmatpush1.msra.mxu0 %v781
  %1482 = vmatprep.subr.mxu0 0.0
  %1483 = vmatpush1.msra.mxu0 %v780
  %1484 = vmatprep.subr.mxu0 0.0
  %1485 = vmatpush1.msra.mxu0 %v779
  %1486 = vmatprep.subr.mxu0 0.0
  %1487 = vmatpush1.msra.mxu0 %v778
  %1488 = vmatprep.subr.mxu0 0.0
  %1489 = vmatpush1.msra.mxu0 %v777
  %1490 = vmatprep.subr.mxu0 0.0
  %1491 = vmatpush1.msra.mxu0 %v776
  %1492 = vmatprep.subr.mxu0 0.0
  %1493 = vmatpush2.msra.mxu0 %v807
  %1494 = vmatprep.subr.mxu0 0.0
  %1495 = vmatpush2.msra.mxu0 %v806
  %1496 = vmatprep.subr.mxu0 0.0
  %1497 = vmatpush2.msra.mxu0 %v805
  %1498 = vmatprep.subr.mxu0 0.0
  %1499 = vmatpush2.msra.mxu0 %v804
  %1500 = vmatprep.subr.mxu0 0.0
  %1501 = vmatpush2.msra.mxu0 %v803
  %1502 = vmatprep.subr.mxu0 0.0
  %1503 = vmatpush2.msra.mxu0 %v802
  %1504 = vmatprep.subr.mxu0 0.0
  %1505 = vmatpush2.msra.mxu0 %v801
  %1506 = vmatprep.subr.mxu0 0.0
  %1507 = vmatpush2.msra.mxu0 %v800
  %1508 = vmatprep.subr.mxu0 0.0
  %1509 = vmatpush2.msra.mxu0 %v799
  %1510 = vmatprep.subr.mxu0 0.0
  %1511 = vmatpush2.msra.mxu0 %v798
  %1512 = vmatprep.subr.mxu0 0.0
  %1513 = vmatpush2.msra.mxu0 %v797
  %1514 = vmatprep.subr.mxu0 0.0
  %1515 = vmatpush2.msra.mxu0 %v796
  %1516 = vmatprep.subr.mxu0 0.0
  %1517 = vmatpush2.msra.mxu0 %v795
  %1518 = vmatprep.subr.mxu0 0.0
  %1519 = vmatpush2.msra.mxu0 %v794
  %1520 = vmatprep.subr.mxu0 0.0
  %1521 = vmatpush2.msra.mxu0 %v793
  %1522 = vmatprep.subr.mxu0 0.0
  %1523 = vmatpush2.msra.mxu0 %v792
  %1524 = vmatprep.mubr.f32.mxu0 %v1457
  %1525 = vmatmul.mubr.f32.gmra.mxu0 %v1456
  %v1526 = vpop.f32.mrf.mxu0
  %v1527 = vadd.f32 0.0, %v1526
  %v1528 = vpop.f32.mrf.mxu0
  %1529 = vdwg.mxu0
  %1530 = vmatprep.subr.mxu0 0.0
  %1531 = vmatpush1.msra.mxu0 %v823
  %1532 = vmatprep.subr.mxu0 0.0
  %1533 = vmatpush1.msra.mxu0 %v822
  %1534 = vmatprep.subr.mxu0 0.0
  %1535 = vmatpush1.msra.mxu0 %v821
  %1536 = vmatprep.subr.mxu0 0.0
  %1537 = vmatpush1.msra.mxu0 %v820
  %1538 = vmatprep.subr.mxu0 0.0
  %1539 = vmatpush1.msra.mxu0 %v819
  %1540 = vmatprep.subr.mxu0 0.0
  %1541 = vmatpush1.msra.mxu0 %v818
  %1542 = vmatprep.subr.mxu0 0.0
  %1543 = vmatpush1.msra.mxu0 %v817
  %1544 = vmatprep.subr.mxu0 0.0
  %1545 = vmatpush1.msra.mxu0 %v816
  %1546 = vmatprep.subr.mxu0 0.0
  %1547 = vmatpush1.msra.mxu0 %v815
  %1548 = vmatprep.subr.mxu0 0.0
  %1549 = vmatpush1.msra.mxu0 %v814
  %1550 = vmatprep.subr.mxu0 0.0
  %1551 = vmatpush1.msra.mxu0 %v813
  %1552 = vmatprep.subr.mxu0 0.0
  %1553 = vmatpush1.msra.mxu0 %v812
  %1554 = vmatprep.subr.mxu0 0.0
  %1555 = vmatpush1.msra.mxu0 %v811
  %1556 = vmatprep.subr.mxu0 0.0
  %1557 = vmatpush1.msra.mxu0 %v810
  %1558 = vmatprep.subr.mxu0 0.0
  %1559 = vmatpush1.msra.mxu0 %v809
  %1560 = vmatprep.subr.mxu0 0.0
  %1561 = vmatpush1.msra.mxu0 %v808
  %1562 = vmatprep.subr.mxu0 0.0
  %1563 = vmatpush2.msra.mxu0 %v839
  %1564 = vmatprep.subr.mxu0 0.0
  %1565 = vmatpush2.msra.mxu0 %v838
  %1566 = vmatprep.subr.mxu0 0.0
  %1567 = vmatpush2.msra.mxu0 %v837
  %1568 = vmatprep.subr.mxu0 0.0
  %1569 = vmatpush2.msra.mxu0 %v836
  %1570 = vmatprep.subr.mxu0 0.0
  %1571 = vmatpush2.msra.mxu0 %v835
  %1572 = vmatprep.subr.mxu0 0.0
  %1573 = vmatpush2.msra.mxu0 %v834
  %1574 = vmatprep.subr.mxu0 0.0
  %1575 = vmatpush2.msra.mxu0 %v833
  %1576 = vmatprep.subr.mxu0 0.0
  %1577 = vmatpush2.msra.mxu0 %v832
  %1578 = vmatprep.subr.mxu0 0.0
  %1579 = vmatpush2.msra.mxu0 %v831
  %1580 = vmatprep.subr.mxu0 0.0
  %1581 = vmatpush2.msra.mxu0 %v830
  %1582 = vmatprep.subr.mxu0 0.0
  %1583 = vmatpush2.msra.mxu0 %v829
  %1584 = vmatprep.subr.mxu0 0.0
  %1585 = vmatpush2.msra.mxu0 %v828
  %1586 = vmatprep.subr.mxu0 0.0
  %1587 = vmatpush2.msra.mxu0 %v827
  %1588 = vmatprep.subr.mxu0 0.0
  %1589 = vmatpush2.msra.mxu0 %v826
  %1590 = vmatprep.subr.mxu0 0.0
  %1591 = vmatpush2.msra.mxu0 %v825
  %1592 = vmatprep.subr.mxu0 0.0
  %1593 = vmatpush2.msra.mxu0 %v824
  %1594 = vmatprep.mubr.f32.mxu0 %v1459
  %1595 = vmatmul.mubr.f32.gmra.mxu0 %v1458
  %v1596 = vpop.f32.mrf.mxu0
  %v1597 = vadd.f32 %v1527, %v1596
  %v1598 = vpop.f32.mrf.mxu0
  %1599 = vdwg.mxu0
  %v1600 = vadd.f32 %v977, %v1597
  %v1601 = vsel %vm980, %v1600, -inf
  %v1602 = vrot.slane %v1601, 4
  %v1603 = vmax.f32 %v1601, %v1602
  %v1604 = vrot.slane %v1603, 2
  %v1605 = vmax.f32 %v1603, %v1604
  %v1606 = vrot.slane %v1605, 1
  %v1607 = vmax.f32 %v1605, %v1606
  %v1608 = vsub.f32 %v1600, %v1607
  %v1609 = vmul.f32 %v1608, 1.442695
  %v1610 = vpow.pop %v1609
  %v1611 = vsel %vm980, %v1610, 0.0
  %v1612 = vrot.slane %v1611, 4
  %v1613 = vadd.f32 %v1611, %v1612
  %v1614 = vrot.slane %v1613, 2
  %v1615 = vadd.f32 %v1613, %v1614
  %v1616 = vrot.slane %v1615, 1
  %v1617 = vadd.f32 %v1615, %v1616
  %v1618 = vrcp.pop %v1617
  %v1619 = vmul.f32 %v1610, %v1618
  %v1621 = vsel %vm218, %v1619, 0
  %1623 = vmatprep.subr.mxu0 0.0
  %1624 = vmatpush1.msra.mxu0 0.0
  %1625 = vmatprep.subr.mxu0 0.0
  %1626 = vmatpush1.msra.mxu0 0.0
  %1627 = vmatprep.subr.mxu0 0.0
  %1628 = vmatpush1.msra.mxu0 0.0
  %1629 = vmatprep.subr.mxu0 0.0
  %1630 = vmatpush1.msra.mxu0 0.0
  %1631 = vmatprep.subr.mxu0 0.0
  %1632 = vmatpush1.msra.mxu0 0.0
  %1633 = vmatprep.subr.mxu0 0.0
  %1634 = vmatpush1.msra.mxu0 0.0
  %1635 = vmatprep.subr.mxu0 0.0
  %1636 = vmatpush1.msra.mxu0 0.0
  %1637 = vmatprep.subr.mxu0 0.0
  %1638 = vmatpush1.msra.mxu0 0.0
  %1639 = vmatprep.subr.mxu0 0.0
  %1640 = vmatpush1.msra.mxu0 0.0
  %1641 = vmatprep.subr.mxu0 0.0
  %1642 = vmatpush1.msra.mxu0 0.0
  %1643 = vmatprep.subr.mxu0 0.0
  %1644 = vmatpush1.msra.mxu0 0.0
  %1645 = vmatprep.subr.mxu0 0.0
  %1646 = vmatpush1.msra.mxu0 0.0
  %1647 = vmatprep.subr.mxu0 %v215
  %1648 = vmatpush1.msra.mxu0 %v214
  %1649 = vmatprep.subr.mxu0 %v211
  %1650 = vmatpush1.msra.mxu0 %v210
  %1651 = vmatprep.subr.mxu0 %v207
  %1652 = vmatpush1.msra.mxu0 %v206
  %1653 = vmatprep.subr.mxu0 %v203
  %1654 = vmatpush1.msra.mxu0 %v202
  %1655 = vmatprep.subr.mxu0 0.0
  %1656 = vmatpush2.msra.mxu0 0.0
  %1657 = vmatprep.subr.mxu0 0.0
  %1658 = vmatpush2.msra.mxu0 0.0
  %1659 = vmatprep.subr.mxu0 0.0
  %1660 = vmatpush2.msra.mxu0 0.0
  %1661 = vmatprep.subr.mxu0 0.0
  %1662 = vmatpush2.msra.mxu0 0.0
  %1663 = vmatprep.subr.mxu0 0.0
  %1664 = vmatpush2.msra.mxu0 0.0
  %1665 = vmatprep.subr.mxu0 0.0
  %1666 = vmatpush2.msra.mxu0 0.0
  %1667 = vmatprep.subr.mxu0 0.0
  %1668 = vmatpush2.msra.mxu0 0.0
  %1669 = vmatprep.subr.mxu0 0.0
  %1670 = vmatpush2.msra.mxu0 0.0
  %1671 = vmatprep.subr.mxu0 0.0
  %1672 = vmatpush2.msra.mxu0 0.0
  %1673 = vmatprep.subr.mxu0 0.0
  %1674 = vmatpush2.msra.mxu0 0.0
  %1675 = vmatprep.subr.mxu0 0.0
  %1676 = vmatpush2.msra.mxu0 0.0
  %1677 = vmatprep.subr.mxu0 0.0
  %1678 = vmatpush2.msra.mxu0 0.0
  %1679 = vmatprep.subr.mxu0 0.0
  %1680 = vmatpush2.msra.mxu0 0.0
  %1681 = vmatprep.subr.mxu0 0.0
  %1682 = vmatpush2.msra.mxu0 0.0
  %1683 = vmatprep.subr.mxu0 0.0
  %1684 = vmatpush2.msra.mxu0 0.0
  %1685 = vmatprep.subr.mxu0 0.0
  %1686 = vmatpush2.msra.mxu0 0.0
  %1687 = vmatprep.mubr.f32.mxu0 0.0
  %1688 = vmatmul.mubr.f32.gmra.mxu0 %v1621
  %v1689 = vpop.f32.mrf.mxu0
  %v1690 = vadd.f32 0.0, %v1689
  %v1691 = vpop.f32.mrf.mxu0
  %v1692 = vadd.f32 0.0, %v1691
  %1693 = vdwg.mxu0
  %1694 = vmatprep.subr.mxu0 0.0
  %1695 = vmatpush1.msra.mxu0 0.0
  %1696 = vmatprep.subr.mxu0 0.0
  %1697 = vmatpush1.msra.mxu0 0.0
  %1698 = vmatprep.subr.mxu0 0.0
  %1699 = vmatpush1.msra.mxu0 0.0
  %1700 = vmatprep.subr.mxu0 0.0
  %1701 = vmatpush1.msra.mxu0 0.0
  %1702 = vmatprep.subr.mxu0 0.0
  %1703 = vmatpush1.msra.mxu0 0.0
  %1704 = vmatprep.subr.mxu0 0.0
  %1705 = vmatpush1.msra.mxu0 0.0
  %1706 = vmatprep.subr.mxu0 0.0
  %1707 = vmatpush1.msra.mxu0 0.0
  %1708 = vmatprep.subr.mxu0 0.0
  %1709 = vmatpush1.msra.mxu0 0.0
  %1710 = vmatprep.subr.mxu0 0.0
  %1711 = vmatpush1.msra.mxu0 0.0
  %1712 = vmatprep.subr.mxu0 0.0
  %1713 = vmatpush1.msra.mxu0 0.0
  %1714 = vmatprep.subr.mxu0 0.0
  %1715 = vmatpush1.msra.mxu0 0.0
  %1716 = vmatprep.subr.mxu0 0.0
  %1717 = vmatpush1.msra.mxu0 0.0
  %1718 = vmatprep.subr.mxu0 %v217
  %1719 = vmatpush1.msra.mxu0 %v216
  %1720 = vmatprep.subr.mxu0 %v213
  %1721 = vmatpush1.msra.mxu0 %v212
  %1722 = vmatprep.subr.mxu0 %v209
  %1723 = vmatpush1.msra.mxu0 %v208
  %1724 = vmatprep.subr.mxu0 %v205
  %1725 = vmatpush1.msra.mxu0 %v204
  %1726 = vmatprep.subr.mxu0 0.0
  %1727 = vmatpush2.msra.mxu0 0.0
  %1728 = vmatprep.subr.mxu0 0.0
  %1729 = vmatpush2.msra.mxu0 0.0
  %1730 = vmatprep.subr.mxu0 0.0
  %1731 = vmatpush2.msra.mxu0 0.0
  %1732 = vmatprep.subr.mxu0 0.0
  %1733 = vmatpush2.msra.mxu0 0.0
  %1734 = vmatprep.subr.mxu0 0.0
  %1735 = vmatpush2.msra.mxu0 0.0
  %1736 = vmatprep.subr.mxu0 0.0
  %1737 = vmatpush2.msra.mxu0 0.0
  %1738 = vmatprep.subr.mxu0 0.0
  %1739 = vmatpush2.msra.mxu0 0.0
  %1740 = vmatprep.subr.mxu0 0.0
  %1741 = vmatpush2.msra.mxu0 0.0
  %1742 = vmatprep.subr.mxu0 0.0
  %1743 = vmatpush2.msra.mxu0 0.0
  %1744 = vmatprep.subr.mxu0 0.0
  %1745 = vmatpush2.msra.mxu0 0.0
  %1746 = vmatprep.subr.mxu0 0.0
  %1747 = vmatpush2.msra.mxu0 0.0
  %1748 = vmatprep.subr.mxu0 0.0
  %1749 = vmatpush2.msra.mxu0 0.0
  %1750 = vmatprep.subr.mxu0 0.0
  %1751 = vmatpush2.msra.mxu0 0.0
  %1752 = vmatprep.subr.mxu0 0.0
  %1753 = vmatpush2.msra.mxu0 0.0
  %1754 = vmatprep.subr.mxu0 0.0
  %1755 = vmatpush2.msra.mxu0 0.0
  %1756 = vmatprep.subr.mxu0 0.0
  %1757 = vmatpush2.msra.mxu0 0.0
  %1758 = vmatprep.mubr.f32.mxu0 0.0
  %1759 = vmatmul.mubr.f32.gmra.mxu0 %v1621
  %v1760 = vpop.f32.mrf.mxu0
  %v1761 = vadd.f32 0.0, %v1760
  %v1762 = vpop.f32.mrf.mxu0
  %v1763 = vadd.f32 0.0, %v1762
  %1764 = vdwg.mxu0
  %v1765 = vmul.f32 %v1690, %v127
  %v1766 = vmul.f32 %v1692, %v129
  %v1767 = vmul.f32 %v1761, %v198
  %v1768 = vmul.f32 %v1763, %v200
  %1769 = vmatprep.subr.mxu0 0.0
  %1770 = vmatpush1.msra.mxu0 %v383
  %1771 = vmatprep.subr.mxu0 0.0
  %1772 = vmatpush1.msra.mxu0 %v382
  %1773 = vmatprep.subr.mxu0 0.0
  %1774 = vmatpush1.msra.mxu0 %v381
  %1775 = vmatprep.subr.mxu0 0.0
  %1776 = vmatpush1.msra.mxu0 %v380
  %1777 = vmatprep.subr.mxu0 0.0
  %1778 = vmatpush1.msra.mxu0 %v379
  %1779 = vmatprep.subr.mxu0 0.0
  %1780 = vmatpush1.msra.mxu0 %v378
  %1781 = vmatprep.subr.mxu0 0.0
  %1782 = vmatpush1.msra.mxu0 %v377
  %1783 = vmatprep.subr.mxu0 0.0
  %1784 = vmatpush1.msra.mxu0 %v376
  %1785 = vmatprep.subr.mxu0 0.0
  %1786 = vmatpush1.msra.mxu0 %v375
  %1787 = vmatprep.subr.mxu0 0.0
  %1788 = vmatpush1.msra.mxu0 %v374
  %1789 = vmatprep.subr.mxu0 0.0
  %1790 = vmatpush1.msra.mxu0 %v373
  %1791 = vmatprep.subr.mxu0 0.0
  %1792 = vmatpush1.msra.mxu0 %v372
  %1793 = vmatprep.subr.mxu0 0.0
  %1794 = vmatpush1.msra.mxu0 %v371
  %1795 = vmatprep.subr.mxu0 0.0
  %1796 = vmatpush1.msra.mxu0 %v370
  %1797 = vmatprep.subr.mxu0 0.0
  %1798 = vmatpush1.msra.mxu0 %v369
  %1799 = vmatprep.subr.mxu0 0.0
  %1800 = vmatpush1.msra.mxu0 %v368
  %1801 = vmatprep.subr.mxu0 0.0
  %1802 = vmatpush2.msra.mxu0 %v399
  %1803 = vmatprep.subr.mxu0 0.0
  %1804 = vmatpush2.msra.mxu0 %v398
  %1805 = vmatprep.subr.mxu0 0.0
  %1806 = vmatpush2.msra.mxu0 %v397
  %1807 = vmatprep.subr.mxu0 0.0
  %1808 = vmatpush2.msra.mxu0 %v396
  %1809 = vmatprep.subr.mxu0 0.0
  %1810 = vmatpush2.msra.mxu0 %v395
  %1811 = vmatprep.subr.mxu0 0.0
  %1812 = vmatpush2.msra.mxu0 %v394
  %1813 = vmatprep.subr.mxu0 0.0
  %1814 = vmatpush2.msra.mxu0 %v393
  %1815 = vmatprep.subr.mxu0 0.0
  %1816 = vmatpush2.msra.mxu0 %v392
  %1817 = vmatprep.subr.mxu0 0.0
  %1818 = vmatpush2.msra.mxu0 %v391
  %1819 = vmatprep.subr.mxu0 0.0
  %1820 = vmatpush2.msra.mxu0 %v390
  %1821 = vmatprep.subr.mxu0 0.0
  %1822 = vmatpush2.msra.mxu0 %v389
  %1823 = vmatprep.subr.mxu0 0.0
  %1824 = vmatpush2.msra.mxu0 %v388
  %1825 = vmatprep.subr.mxu0 0.0
  %1826 = vmatpush2.msra.mxu0 %v387
  %1827 = vmatprep.subr.mxu0 0.0
  %1828 = vmatpush2.msra.mxu0 %v386
  %1829 = vmatprep.subr.mxu0 0.0
  %1830 = vmatpush2.msra.mxu0 %v385
  %1831 = vmatprep.subr.mxu0 0.0
  %1832 = vmatpush2.msra.mxu0 %v384
  %1833 = vmatprep.mubr.f32.mxu0 %v1766
  %1834 = vmatmul.mubr.f32.gmra.mxu0 %v1765
  %v1835 = vpop.f32.mrf.mxu0
  %v1836 = vadd.f32 0.0, %v1835
  %v1837 = vpop.f32.mrf.mxu0
  %1838 = vdwg.mxu0
  %1839 = vmatprep.subr.mxu0 0.0
  %1840 = vmatpush1.msra.mxu0 %v415
  %1841 = vmatprep.subr.mxu0 0.0
  %1842 = vmatpush1.msra.mxu0 %v414
  %1843 = vmatprep.subr.mxu0 0.0
  %1844 = vmatpush1.msra.mxu0 %v413
  %1845 = vmatprep.subr.mxu0 0.0
  %1846 = vmatpush1.msra.mxu0 %v412
  %1847 = vmatprep.subr.mxu0 0.0
  %1848 = vmatpush1.msra.mxu0 %v411
  %1849 = vmatprep.subr.mxu0 0.0
  %1850 = vmatpush1.msra.mxu0 %v410
  %1851 = vmatprep.subr.mxu0 0.0
  %1852 = vmatpush1.msra.mxu0 %v409
  %1853 = vmatprep.subr.mxu0 0.0
  %1854 = vmatpush1.msra.mxu0 %v408
  %1855 = vmatprep.subr.mxu0 0.0
  %1856 = vmatpush1.msra.mxu0 %v407
  %1857 = vmatprep.subr.mxu0 0.0
  %1858 = vmatpush1.msra.mxu0 %v406
  %1859 = vmatprep.subr.mxu0 0.0
  %1860 = vmatpush1.msra.mxu0 %v405
  %1861 = vmatprep.subr.mxu0 0.0
  %1862 = vmatpush1.msra.mxu0 %v404
  %1863 = vmatprep.subr.mxu0 0.0
  %1864 = vmatpush1.msra.mxu0 %v403
  %1865 = vmatprep.subr.mxu0 0.0
  %1866 = vmatpush1.msra.mxu0 %v402
  %1867 = vmatprep.subr.mxu0 0.0
  %1868 = vmatpush1.msra.mxu0 %v401
  %1869 = vmatprep.subr.mxu0 0.0
  %1870 = vmatpush1.msra.mxu0 %v400
  %1871 = vmatprep.subr.mxu0 0.0
  %1872 = vmatpush2.msra.mxu0 %v431
  %1873 = vmatprep.subr.mxu0 0.0
  %1874 = vmatpush2.msra.mxu0 %v430
  %1875 = vmatprep.subr.mxu0 0.0
  %1876 = vmatpush2.msra.mxu0 %v429
  %1877 = vmatprep.subr.mxu0 0.0
  %1878 = vmatpush2.msra.mxu0 %v428
  %1879 = vmatprep.subr.mxu0 0.0
  %1880 = vmatpush2.msra.mxu0 %v427
  %1881 = vmatprep.subr.mxu0 0.0
  %1882 = vmatpush2.msra.mxu0 %v426
  %1883 = vmatprep.subr.mxu0 0.0
  %1884 = vmatpush2.msra.mxu0 %v425
  %1885 = vmatprep.subr.mxu0 0.0
  %1886 = vmatpush2.msra.mxu0 %v424
  %1887 = vmatprep.subr.mxu0 0.0
  %1888 = vmatpush2.msra.mxu0 %v423
  %1889 = vmatprep.subr.mxu0 0.0
  %1890 = vmatpush2.msra.mxu0 %v422
  %1891 = vmatprep.subr.mxu0 0.0
  %1892 = vmatpush2.msra.mxu0 %v421
  %1893 = vmatprep.subr.mxu0 0.0
  %1894 = vmatpush2.msra.mxu0 %v420
  %1895 = vmatprep.subr.mxu0 0.0
  %1896 = vmatpush2.msra.mxu0 %v419
  %1897 = vmatprep.subr.mxu0 0.0
  %1898 = vmatpush2.msra.mxu0 %v418
  %1899 = vmatprep.subr.mxu0 0.0
  %1900 = vmatpush2.msra.mxu0 %v417
  %1901 = vmatprep.subr.mxu0 0.0
  %1902 = vmatpush2.msra.mxu0 %v416
  %1903 = vmatprep.mubr.f32.mxu0 %v1768
  %1904 = vmatmul.mubr.f32.gmra.mxu0 %v1767
  %v1905 = vpop.f32.mrf.mxu0
  %v1906 = vadd.f32 %v1836, %v1905
  %v1907 = vpop.f32.mrf.mxu0
  %1908 = vdwg.mxu0
  %v1909 = vmul.f32 %v1906, %v1906
  %v1910 = vsel %vm573, %v1909, 0.0
  %1911 = vadd.xlane.f32.xlu0 %v1910
  %v1912 = vpop.xlane.xlu0 %1911
  %v1913 = vrot.slane %v1912, 4
  %v1914 = vadd.f32 %v1912, %v1913
  %v1915 = vrot.slane %v1914, 2
  %v1916 = vadd.f32 %v1914, %v1915
  %v1917 = vrot.slane %v1916, 1
  %v1918 = vadd.f32 %v1916, %v1917
  %s1919 = vtos %v1918
  %v1920 = vstv %s1919
  %v1921 = vrsqrt.pop %v1920
  %s1922 = vtos %v1921
  %s1923 = smul.f32 %s1919, %s1922
  %s1924 = sadd.f32 %s1919, 1.0
  %v1925 = vstv %s1924
  %v1926 = vrcp.pop %v1925
  %s1927 = vtos %v1926
  %s1928 = smul.f32 %s1923, %s1927
  %v1929 = vstv %s1928
  %v1930 = vmul.f32 %v1906, %v1929
  %1931 = vst.msk [vmem:[%s6] sm:$0x3] %vm573, %v1930
  // Predicated region
  $region26: #{digitcaps_forward.1} parent=0 // pred_check
    _
  $region27: #{digitcaps_forward.1} parent=0 // pred_check_branch
    %1933 = sbr.rel (0) target = $region29
  $region28: #{digitcaps_forward.1} parent=0 // pred_region
    _
  $region29: #{digitcaps_forward.1} parent=0 // pred_fallthru
    _
  // Predicated region
  $region30: #{digitcaps_forward.1} parent=0 // pred_check
    _
  $region31: #{digitcaps_forward.1} parent=0 // pred_check_branch
    %1935 = sbr.rel (0) target = $region33
  $region32: #{digitcaps_forward.1} parent=0 // pred_region
    _
  $region33: #{digitcaps_forward.1} parent=0 // pred_fallthru
    _

</llo_original>
